<compile_context>
chip_gen: v5e
topology: v5e:2x2
jax: 0.10.0
libtpu: 0.0.40
codegen_flags: <defaults>
</compile_context>

<pallas_src>
import functools

import jax
import jax.numpy as jnp
from jax.experimental import pallas as pl
from jax.experimental.pallas import tpu as pltpu


def _round_up(n, m):
    return ((n + m - 1) // m) * m


def _recon_kernel(x_ref, w_ref, gamma_ref, beta_ref, o_ref, up_ref, acc_ref, *,
                  ksize, upscale, pad, eps):
    """Fused nearest-upsample + Conv2d + BatchNorm2d(train stats) + ReLU.

    x_ref:     (B, h, w, Cin_p)          f32  base activation (lane-padded Cin)
    w_ref:     (KH*KW, Cin_p, Cout_p)    bf16 per-tap conv weights
    gamma_ref: (1, Cout_p)               f32  BN scale
    beta_ref:  (1, Cout_p)               f32  BN shift
    o_ref:     (B*Ho*Wo, Cout_p)         f32  lane-dense output slab
    up_ref:    (B, Hp, Wp, Cin_p)        f32  scratch: padded + upsampled image
    acc_ref:   (B*Ho*Wo, Cout_p)         f32  scratch: conv accumulator
    """
    B, h, w, Cin = x_ref.shape
    Hp, Wp = up_ref.shape[1], up_ref.shape[2]
    Ho, Wo = Hp - ksize + 1, Wp - ksize + 1
    rows = B * Ho * Wo

    # ---- nearest upsample + zero pad, fused into a VMEM scratch --------------
    up_ref[...] = jnp.zeros_like(up_ref)
    x = x_ref[...]
    for i in range(h):
        for j in range(w):
            blk = jnp.broadcast_to(x[:, i:i + 1, j:j + 1, :],
                                   (B, upscale, upscale, Cin))
            up_ref[:, pad + i * upscale: pad + (i + 1) * upscale,
                   pad + j * upscale: pad + (j + 1) * upscale, :] = blk

    # ---- conv as per-tap MXU accumulation (no im2col concat) -----------------
    acc_ref[...] = jnp.zeros_like(acc_ref)
    for k in range(ksize * ksize):
        di, dj = k // ksize, k % ksize
        # Wo == 8 and Cin_p == multiple of 128 -> this flatten is layout-free.
        tap = up_ref[:, di:di + Ho, dj:dj + Wo, :].reshape(rows, Cin)
        acc_ref[...] += jnp.dot(tap.astype(jnp.bfloat16), w_ref[k],
                                preferred_element_type=jnp.float32)

    # ---- BatchNorm2d (training-mode batch stats, centered variance) + ReLU ---
    acc = acc_ref[...]
    inv_n = 1.0 / rows
    mean = jnp.sum(acc, axis=0, keepdims=True) * inv_n
    cent = acc - mean
    var = jnp.sum(cent * cent, axis=0, keepdims=True) * inv_n
    ch_scale = jax.lax.rsqrt(var + eps) * gamma_ref[...]
    ch_shift = beta_ref[...] - mean * ch_scale
    o_ref[...] = jnp.maximum(acc * ch_scale + ch_shift, 0.0).astype(o_ref.dtype)


def recon_block(x, weight, bias, gamma, beta, *, img_size, kernel_size,
                scale_factor, eps=1e-5):
    """x: (B, n_patch, hidden) f32.  weight: (KH, KW, Cin, Cout)  [HWIO].
    Returns (B, out_channels, H_out, W_out), matching the PyTorch module."""
    B, n_patch, hidden = x.shape
    h = img_size // 16
    w = img_size // 16
    assert n_patch == h * w, "n_patch must equal (img_size // 16) ** 2"

    s = int(scale_factor)
    pad = 1 if kernel_size == 3 else 0
    Hp, Wp = h * s + 2 * pad, w * s + 2 * pad
    Ho, Wo = Hp - kernel_size + 1, Wp - kernel_size + 1
    Cin, Cout = hidden, weight.shape[-1]
    Cin_p, Cout_p = _round_up(Cin, 128), _round_up(Cout, 128)
    rows = B * Ho * Wo

    # (B, n_patch, hidden) row-major == NHWC (B, h, w, hidden): pure reshape.
    # Lane-pad Cin so every kernel load and the MXU K-dim are 128-lane dense.
    xc = jnp.pad(x.reshape(B, h, w, Cin),
                 ((0, 0), (0, 0), (0, 0), (0, Cin_p - Cin)))

    # Weight -> (KH*KW, Cin_p, Cout_p), bf16 MXU operands (f32 accumulation).
    w_taps = jnp.pad(weight, ((0, 0), (0, 0), (0, Cin_p - Cin),
                              (0, Cout_p - Cout)))
    w_taps = w_taps.reshape(kernel_size * kernel_size, Cin_p, Cout_p)
    w_taps = w_taps.astype(jnp.bfloat16)

    gamma_p = jnp.pad(gamma.reshape(1, Cout).astype(jnp.float32),
                      ((0, 0), (0, Cout_p - Cout)))
    beta_p = jnp.pad(beta.reshape(1, Cout).astype(jnp.float32),
                     ((0, 0), (0, Cout_p - Cout)))
    del bias  # exactly cancelled by the training-mode BatchNorm mean subtraction

    kernel = functools.partial(_recon_kernel, ksize=kernel_size, upscale=s,
                               pad=pad, eps=eps)

    out2d = pl.pallas_call(
        kernel,
        out_shape=jax.ShapeDtypeStruct((rows, Cout_p), x.dtype),
        in_specs=[pl.BlockSpec(memory_space=pltpu.MemorySpace.VMEM)] * 4,
        out_specs=pl.BlockSpec(memory_space=pltpu.MemorySpace.VMEM),
        scratch_shapes=[
            pltpu.VMEM((B, Hp, Wp, Cin_p), jnp.float32),   # upsampled+padded img
            pltpu.VMEM((rows, Cout_p), jnp.float32),       # conv accumulator
        ],
    )(xc, w_taps, gamma_p, beta_p)

    # Slice lane padding off and restore NCHW for parity with the PyTorch module.
    out = out2d[:, :Cout].reshape(B, Ho, Wo, Cout)
    return jnp.transpose(out, (0, 3, 1, 2))


def _recon_block_ref(x, weight, bias, gamma, beta, *, img_size, kernel_size,
                     scale_factor, eps=1e-5):
    """Pure-JAX reference (same math as the PyTorch module, training-mode BN)."""
    B, n_patch, hidden = x.shape
    h = w = img_size // 16
    s = int(scale_factor)
    pad = 1 if kernel_size == 3 else 0
    xc = x.reshape(B, h, w, hidden)
    xu = jnp.repeat(jnp.repeat(xc, s, axis=1), s, axis=2)
    out = jax.lax.conv_general_dilated(
        xu, weight, window_strides=(1, 1), padding=[(pad, pad), (pad, pad)],
        dimension_numbers=("NHWC", "HWIO", "NHWC")) + bias
    mean = out.mean(axis=(0, 1, 2), keepdims=True)
    var = ((out - mean) ** 2).mean(axis=(0, 1, 2), keepdims=True)
    y = (out - mean) * jax.lax.rsqrt(var + eps) * gamma + beta
    y = jnp.maximum(y, 0.0)
    return jnp.transpose(y, (0, 3, 1, 2))


if __name__ == "__main__":
    # Shapes consistent with the module:
    #   img_size=64 -> h=w=4 -> n_patch=16; hidden=in_channels=32;
    #   out_channels=16; kernel_size=3; scale_factor=2.
    B = 2
    img_size = 64
    in_channels = 32
    out_channels = 16
    kernel_size = 3
    scale_factor = 2
    h = w = img_size // 16
    n_patch = h * w

    key = jax.random.PRNGKey(0)
    kx, kw_, kb = jax.random.split(key, 3)

    x = jax.random.normal(kx, (B, n_patch, in_channels), dtype=jnp.float32)
    weight = 0.1 * jax.random.normal(
        kw_, (kernel_size, kernel_size, in_channels, out_channels),
        dtype=jnp.float32)
    bias = 0.05 * jax.random.normal(kb, (out_channels,), dtype=jnp.float32)
    # BatchNorm2d default init: gamma = 1, beta = 0.
    gamma = jnp.ones((out_channels,), dtype=jnp.float32)
    beta = jnp.zeros((out_channels,), dtype=jnp.float32)

    out = recon_block(x, weight, bias, gamma, beta,
                      img_size=img_size, kernel_size=kernel_size,
                      scale_factor=scale_factor)
    out = jax.block_until_ready(out)

    expected_hw = h * scale_factor  # pad=1 with k=3 keeps the upsampled size
    assert out.shape == (B, out_channels, expected_hw, expected_hw), out.shape
    assert bool(jnp.all(jnp.isfinite(out)))
    assert bool(jnp.all(out >= 0.0))          # ReLU output
    assert bool(jnp.any(out > 0.0))           # not degenerate

    ref = _recon_block_ref(x, weight, bias, gamma, beta,
                           img_size=img_size, kernel_size=kernel_size,
                           scale_factor=scale_factor)
    max_err = float(jnp.max(jnp.abs(out - ref)))
    assert max_err < 1e-1, f"max abs error vs reference: {max_err}"

    print("KERNEL_OK")
</pallas_src>

<mosaic_0001>
module attributes {stable_mosaic.version = 11 : i64} {
  func.func @_recon_kernel(%arg0: memref<2x4x4x128xf32, #tpu.memory_space<vmem>>, %arg1: memref<9x128x128xbf16, #tpu.memory_space<vmem>>, %arg2: memref<1x128xf32, #tpu.memory_space<vmem>>, %arg3: memref<1x128xf32, #tpu.memory_space<vmem>>, %arg4: memref<128x128xf32, #tpu.memory_space<vmem>>, %arg5: memref<2x10x10x128xf32, #tpu.memory_space<vmem>>, %arg6: memref<128x128xf32, #tpu.memory_space<vmem>>) attributes {dimension_semantics = [], scalar_prefetch = 0 : i64, scratch_operands = 2 : i64, tpu.core_type = #tpu.core_type<tc>} {
    %cst = arith.constant 0.000000e+00 : f32
    %0 = vector.broadcast %cst : f32 to vector<2x10x10x128xf32>
    %c0 = arith.constant 0 : index
    %c0_0 = arith.constant 0 : index
    %c0_1 = arith.constant 0 : index
    %c0_2 = arith.constant 0 : index
    %1 = vector.load %arg5[%c0, %c0_0, %c0_1, %c0_2] : memref<2x10x10x128xf32, #tpu.memory_space<vmem>>, vector<2x10x10x128xf32>
    tpu.vector_store %arg5[%c0, %c0_0, %c0_1, %c0_2], %0 {strides = array<i32>} : memref<2x10x10x128xf32, #tpu.memory_space<vmem>>, vector<2x10x10x128xf32>,
    %c0_3 = arith.constant 0 : index
    %c0_4 = arith.constant 0 : index
    %c0_5 = arith.constant 0 : index
    %c0_6 = arith.constant 0 : index
    %2 = vector.load %arg0[%c0_3, %c0_4, %c0_5, %c0_6] : memref<2x4x4x128xf32, #tpu.memory_space<vmem>>, vector<2x4x4x128xf32>
    %3 = vector.extract_strided_slice %2 {offsets = [0, 0, 0, 0], sizes = [2, 1, 1, 128], strides = [1, 1, 1, 1]} : vector<2x4x4x128xf32> to vector<2x1x1x128xf32>
    %4 = vector.shape_cast %3 : vector<2x1x1x128xf32> to vector<2x1x1x128xf32>
    %5 = vector.broadcast %4 : vector<2x1x1x128xf32> to vector<2x2x2x128xf32>
    %c0_7 = arith.constant 0 : index
    %c1 = arith.constant 1 : index
    %c1_8 = arith.constant 1 : index
    %c0_9 = arith.constant 0 : index
    %6 = vector.load %arg5[%c0_7, %c1, %c1_8, %c0_9] : memref<2x10x10x128xf32, #tpu.memory_space<vmem>>, vector<2x2x2x128xf32>
    tpu.vector_store %arg5[%c0_7, %c1, %c1_8, %c0_9], %5 {strides = array<i32>} : memref<2x10x10x128xf32, #tpu.memory_space<vmem>>, vector<2x2x2x128xf32>,
    %7 = vector.extract_strided_slice %2 {offsets = [0, 0, 1, 0], sizes = [2, 1, 1, 128], strides = [1, 1, 1, 1]} : vector<2x4x4x128xf32> to vector<2x1x1x128xf32>
    %8 = vector.shape_cast %7 : vector<2x1x1x128xf32> to vector<2x1x1x128xf32>
    %9 = vector.broadcast %8 : vector<2x1x1x128xf32> to vector<2x2x2x128xf32>
    %c0_10 = arith.constant 0 : index
    %c1_11 = arith.constant 1 : index
    %c3 = arith.constant 3 : index
    %c0_12 = arith.constant 0 : index
    %10 = vector.load %arg5[%c0_10, %c1_11, %c3, %c0_12] : memref<2x10x10x128xf32, #tpu.memory_space<vmem>>, vector<2x2x2x128xf32>
    tpu.vector_store %arg5[%c0_10, %c1_11, %c3, %c0_12], %9 {strides = array<i32>} : memref<2x10x10x128xf32, #tpu.memory_space<vmem>>, vector<2x2x2x128xf32>,
    %11 = vector.extract_strided_slice %2 {offsets = [0, 0, 2, 0], sizes = [2, 1, 1, 128], strides = [1, 1, 1, 1]} : vector<2x4x4x128xf32> to vector<2x1x1x128xf32>
    %12 = vector.shape_cast %11 : vector<2x1x1x128xf32> to vector<2x1x1x128xf32>
    %13 = vector.broadcast %12 : vector<2x1x1x128xf32> to vector<2x2x2x128xf32>
    %c0_13 = arith.constant 0 : index
    %c1_14 = arith.constant 1 : index
    %c5 = arith.constant 5 : index
    %c0_15 = arith.constant 0 : index
    %14 = vector.load %arg5[%c0_13, %c1_14, %c5, %c0_15] : memref<2x10x10x128xf32, #tpu.memory_space<vmem>>, vector<2x2x2x128xf32>
    tpu.vector_store %arg5[%c0_13, %c1_14, %c5, %c0_15], %13 {strides = array<i32>} : memref<2x10x10x128xf32, #tpu.memory_space<vmem>>, vector<2x2x2x128xf32>,
    %15 = vector.extract_strided_slice %2 {offsets = [0, 0, 3, 0], sizes = [2, 1, 1, 128], strides = [1, 1, 1, 1]} : vector<2x4x4x128xf32> to vector<2x1x1x128xf32>
    %16 = vector.shape_cast %15 : vector<2x1x1x128xf32> to vector<2x1x1x128xf32>
    %17 = vector.broadcast %16 : vector<2x1x1x128xf32> to vector<2x2x2x128xf32>
    %c0_16 = arith.constant 0 : index
    %c1_17 = arith.constant 1 : index
    %c7 = arith.constant 7 : index
    %c0_18 = arith.constant 0 : index
    %18 = vector.load %arg5[%c0_16, %c1_17, %c7, %c0_18] : memref<2x10x10x128xf32, #tpu.memory_space<vmem>>, vector<2x2x2x128xf32>
    tpu.vector_store %arg5[%c0_16, %c1_17, %c7, %c0_18], %17 {strides = array<i32>} : memref<2x10x10x128xf32, #tpu.memory_space<vmem>>, vector<2x2x2x128xf32>,
    %19 = vector.extract_strided_slice %2 {offsets = [0, 1, 0, 0], sizes = [2, 1, 1, 128], strides = [1, 1, 1, 1]} : vector<2x4x4x128xf32> to vector<2x1x1x128xf32>
    %20 = vector.shape_cast %19 : vector<2x1x1x128xf32> to vector<2x1x1x128xf32>
    %21 = vector.broadcast %20 : vector<2x1x1x128xf32> to vector<2x2x2x128xf32>
    %c0_19 = arith.constant 0 : index
    %c3_20 = arith.constant 3 : index
    %c1_21 = arith.constant 1 : index
    %c0_22 = arith.constant 0 : index
    %22 = vector.load %arg5[%c0_19, %c3_20, %c1_21, %c0_22] : memref<2x10x10x128xf32, #tpu.memory_space<vmem>>, vector<2x2x2x128xf32>
    tpu.vector_store %arg5[%c0_19, %c3_20, %c1_21, %c0_22], %21 {strides = array<i32>} : memref<2x10x10x128xf32, #tpu.memory_space<vmem>>, vector<2x2x2x128xf32>,
    %23 = vector.extract_strided_slice %2 {offsets = [0, 1, 1, 0], sizes = [2, 1, 1, 128], strides = [1, 1, 1, 1]} : vector<2x4x4x128xf32> to vector<2x1x1x128xf32>
    %24 = vector.shape_cast %23 : vector<2x1x1x128xf32> to vector<2x1x1x128xf32>
    %25 = vector.broadcast %24 : vector<2x1x1x128xf32> to vector<2x2x2x128xf32>
    %c0_23 = arith.constant 0 : index
    %c3_24 = arith.constant 3 : index
    %c3_25 = arith.constant 3 : index
    %c0_26 = arith.constant 0 : index
    %26 = vector.load %arg5[%c0_23, %c3_24, %c3_25, %c0_26] : memref<2x10x10x128xf32, #tpu.memory_space<vmem>>, vector<2x2x2x128xf32>
    tpu.vector_store %arg5[%c0_23, %c3_24, %c3_25, %c0_26], %25 {strides = array<i32>} : memref<2x10x10x128xf32, #tpu.memory_space<vmem>>, vector<2x2x2x128xf32>,
    %27 = vector.extract_strided_slice %2 {offsets = [0, 1, 2, 0], sizes = [2, 1, 1, 128], strides = [1, 1, 1, 1]} : vector<2x4x4x128xf32> to vector<2x1x1x128xf32>
    %28 = vector.shape_cast %27 : vector<2x1x1x128xf32> to vector<2x1x1x128xf32>
    %29 = vector.broadcast %28 : vector<2x1x1x128xf32> to vector<2x2x2x128xf32>
    %c0_27 = arith.constant 0 : index
    %c3_28 = arith.constant 3 : index
    %c5_29 = arith.constant 5 : index
    %c0_30 = arith.constant 0 : index
    %30 = vector.load %arg5[%c0_27, %c3_28, %c5_29, %c0_30] : memref<2x10x10x128xf32, #tpu.memory_space<vmem>>, vector<2x2x2x128xf32>
    tpu.vector_store %arg5[%c0_27, %c3_28, %c5_29, %c0_30], %29 {strides = array<i32>} : memref<2x10x10x128xf32, #tpu.memory_space<vmem>>, vector<2x2x2x128xf32>,
    %31 = vector.extract_strided_slice %2 {offsets = [0, 1, 3, 0], sizes = [2, 1, 1, 128], strides = [1, 1, 1, 1]} : vector<2x4x4x128xf32> to vector<2x1x1x128xf32>
    %32 = vector.shape_cast %31 : vector<2x1x1x128xf32> to vector<2x1x1x128xf32>
    %33 = vector.broadcast %32 : vector<2x1x1x128xf32> to vector<2x2x2x128xf32>
    %c0_31 = arith.constant 0 : index
    %c3_32 = arith.constant 3 : index
    %c7_33 = arith.constant 7 : index
    %c0_34 = arith.constant 0 : index
    %34 = vector.load %arg5[%c0_31, %c3_32, %c7_33, %c0_34] : memref<2x10x10x128xf32, #tpu.memory_space<vmem>>, vector<2x2x2x128xf32>
    tpu.vector_store %arg5[%c0_31, %c3_32, %c7_33, %c0_34], %33 {strides = array<i32>} : memref<2x10x10x128xf32, #tpu.memory_space<vmem>>, vector<2x2x2x128xf32>,
    %35 = vector.extract_strided_slice %2 {offsets = [0, 2, 0, 0], sizes = [2, 1, 1, 128], strides = [1, 1, 1, 1]} : vector<2x4x4x128xf32> to vector<2x1x1x128xf32>
    %36 = vector.shape_cast %35 : vector<2x1x1x128xf32> to vector<2x1x1x128xf32>
    %37 = vector.broadcast %36 : vector<2x1x1x128xf32> to vector<2x2x2x128xf32>
    %c0_35 = arith.constant 0 : index
    %c5_36 = arith.constant 5 : index
    %c1_37 = arith.constant 1 : index
    %c0_38 = arith.constant 0 : index
    %38 = vector.load %arg5[%c0_35, %c5_36, %c1_37, %c0_38] : memref<2x10x10x128xf32, #tpu.memory_space<vmem>>, vector<2x2x2x128xf32>
    tpu.vector_store %arg5[%c0_35, %c5_36, %c1_37, %c0_38], %37 {strides = array<i32>} : memref<2x10x10x128xf32, #tpu.memory_space<vmem>>, vector<2x2x2x128xf32>,
    %39 = vector.extract_strided_slice %2 {offsets = [0, 2, 1, 0], sizes = [2, 1, 1, 128], strides = [1, 1, 1, 1]} : vector<2x4x4x128xf32> to vector<2x1x1x128xf32>
    %40 = vector.shape_cast %39 : vector<2x1x1x128xf32> to vector<2x1x1x128xf32>
    %41 = vector.broadcast %40 : vector<2x1x1x128xf32> to vector<2x2x2x128xf32>
    %c0_39 = arith.constant 0 : index
    %c5_40 = arith.constant 5 : index
    %c3_41 = arith.constant 3 : index
    %c0_42 = arith.constant 0 : index
    %42 = vector.load %arg5[%c0_39, %c5_40, %c3_41, %c0_42] : memref<2x10x10x128xf32, #tpu.memory_space<vmem>>, vector<2x2x2x128xf32>
    tpu.vector_store %arg5[%c0_39, %c5_40, %c3_41, %c0_42], %41 {strides = array<i32>} : memref<2x10x10x128xf32, #tpu.memory_space<vmem>>, vector<2x2x2x128xf32>,
    %43 = vector.extract_strided_slice %2 {offsets = [0, 2, 2, 0], sizes = [2, 1, 1, 128], strides = [1, 1, 1, 1]} : vector<2x4x4x128xf32> to vector<2x1x1x128xf32>
    %44 = vector.shape_cast %43 : vector<2x1x1x128xf32> to vector<2x1x1x128xf32>
    %45 = vector.broadcast %44 : vector<2x1x1x128xf32> to vector<2x2x2x128xf32>
    %c0_43 = arith.constant 0 : index
    %c5_44 = arith.constant 5 : index
    %c5_45 = arith.constant 5 : index
    %c0_46 = arith.constant 0 : index
    %46 = vector.load %arg5[%c0_43, %c5_44, %c5_45, %c0_46] : memref<2x10x10x128xf32, #tpu.memory_space<vmem>>, vector<2x2x2x128xf32>
    tpu.vector_store %arg5[%c0_43, %c5_44, %c5_45, %c0_46], %45 {strides = array<i32>} : memref<2x10x10x128xf32, #tpu.memory_space<vmem>>, vector<2x2x2x128xf32>,
    %47 = vector.extract_strided_slice %2 {offsets = [0, 2, 3, 0], sizes = [2, 1, 1, 128], strides = [1, 1, 1, 1]} : vector<2x4x4x128xf32> to vector<2x1x1x128xf32>
    %48 = vector.shape_cast %47 : vector<2x1x1x128xf32> to vector<2x1x1x128xf32>
    %49 = vector.broadcast %48 : vector<2x1x1x128xf32> to vector<2x2x2x128xf32>
    %c0_47 = arith.constant 0 : index
    %c5_48 = arith.constant 5 : index
    %c7_49 = arith.constant 7 : index
    %c0_50 = arith.constant 0 : index
    %50 = vector.load %arg5[%c0_47, %c5_48, %c7_49, %c0_50] : memref<2x10x10x128xf32, #tpu.memory_space<vmem>>, vector<2x2x2x128xf32>
    tpu.vector_store %arg5[%c0_47, %c5_48, %c7_49, %c0_50], %49 {strides = array<i32>} : memref<2x10x10x128xf32, #tpu.memory_space<vmem>>, vector<2x2x2x128xf32>,
    %51 = vector.extract_strided_slice %2 {offsets = [0, 3, 0, 0], sizes = [2, 1, 1, 128], strides = [1, 1, 1, 1]} : vector<2x4x4x128xf32> to vector<2x1x1x128xf32>
    %52 = vector.shape_cast %51 : vector<2x1x1x128xf32> to vector<2x1x1x128xf32>
    %53 = vector.broadcast %52 : vector<2x1x1x128xf32> to vector<2x2x2x128xf32>
    %c0_51 = arith.constant 0 : index
    %c7_52 = arith.constant 7 : index
    %c1_53 = arith.constant 1 : index
    %c0_54 = arith.constant 0 : index
    %54 = vector.load %arg5[%c0_51, %c7_52, %c1_53, %c0_54] : memref<2x10x10x128xf32, #tpu.memory_space<vmem>>, vector<2x2x2x128xf32>
    tpu.vector_store %arg5[%c0_51, %c7_52, %c1_53, %c0_54], %53 {strides = array<i32>} : memref<2x10x10x128xf32, #tpu.memory_space<vmem>>, vector<2x2x2x128xf32>,
    %55 = vector.extract_strided_slice %2 {offsets = [0, 3, 1, 0], sizes = [2, 1, 1, 128], strides = [1, 1, 1, 1]} : vector<2x4x4x128xf32> to vector<2x1x1x128xf32>
    %56 = vector.shape_cast %55 : vector<2x1x1x128xf32> to vector<2x1x1x128xf32>
    %57 = vector.broadcast %56 : vector<2x1x1x128xf32> to vector<2x2x2x128xf32>
    %c0_55 = arith.constant 0 : index
    %c7_56 = arith.constant 7 : index
    %c3_57 = arith.constant 3 : index
    %c0_58 = arith.constant 0 : index
    %58 = vector.load %arg5[%c0_55, %c7_56, %c3_57, %c0_58] : memref<2x10x10x128xf32, #tpu.memory_space<vmem>>, vector<2x2x2x128xf32>
    tpu.vector_store %arg5[%c0_55, %c7_56, %c3_57, %c0_58], %57 {strides = array<i32>} : memref<2x10x10x128xf32, #tpu.memory_space<vmem>>, vector<2x2x2x128xf32>,
    %59 = vector.extract_strided_slice %2 {offsets = [0, 3, 2, 0], sizes = [2, 1, 1, 128], strides = [1, 1, 1, 1]} : vector<2x4x4x128xf32> to vector<2x1x1x128xf32>
    %60 = vector.shape_cast %59 : vector<2x1x1x128xf32> to vector<2x1x1x128xf32>
    %61 = vector.broadcast %60 : vector<2x1x1x128xf32> to vector<2x2x2x128xf32>
    %c0_59 = arith.constant 0 : index
    %c7_60 = arith.constant 7 : index
    %c5_61 = arith.constant 5 : index
    %c0_62 = arith.constant 0 : index
    %62 = vector.load %arg5[%c0_59, %c7_60, %c5_61, %c0_62] : memref<2x10x10x128xf32, #tpu.memory_space<vmem>>, vector<2x2x2x128xf32>
    tpu.vector_store %arg5[%c0_59, %c7_60, %c5_61, %c0_62], %61 {strides = array<i32>} : memref<2x10x10x128xf32, #tpu.memory_space<vmem>>, vector<2x2x2x128xf32>,
    %63 = vector.extract_strided_slice %2 {offsets = [0, 3, 3, 0], sizes = [2, 1, 1, 128], strides = [1, 1, 1, 1]} : vector<2x4x4x128xf32> to vector<2x1x1x128xf32>
    %64 = vector.shape_cast %63 : vector<2x1x1x128xf32> to vector<2x1x1x128xf32>
    %65 = vector.broadcast %64 : vector<2x1x1x128xf32> to vector<2x2x2x128xf32>
    %c0_63 = arith.constant 0 : index
    %c7_64 = arith.constant 7 : index
    %c7_65 = arith.constant 7 : index
    %c0_66 = arith.constant 0 : index
    %66 = vector.load %arg5[%c0_63, %c7_64, %c7_65, %c0_66] : memref<2x10x10x128xf32, #tpu.memory_space<vmem>>, vector<2x2x2x128xf32>
    tpu.vector_store %arg5[%c0_63, %c7_64, %c7_65, %c0_66], %65 {strides = array<i32>} : memref<2x10x10x128xf32, #tpu.memory_space<vmem>>, vector<2x2x2x128xf32>,
    %cst_67 = arith.constant 0.000000e+00 : f32
    %67 = vector.broadcast %cst_67 : f32 to vector<128x128xf32>
    %c0_68 = arith.constant 0 : index
    %c0_69 = arith.constant 0 : index
    %68 = vector.load %arg6[%c0_68, %c0_69] : memref<128x128xf32, #tpu.memory_space<vmem>>, vector<128x128xf32>
    tpu.vector_store %arg6[%c0_68, %c0_69], %67 {strides = array<i32>} : memref<128x128xf32, #tpu.memory_space<vmem>>, vector<128x128xf32>,
    %c0_70 = arith.constant 0 : index
    %c0_71 = arith.constant 0 : index
    %c0_72 = arith.constant 0 : index
    %c0_73 = arith.constant 0 : index
    %69 = vector.load %arg5[%c0_70, %c0_71, %c0_72, %c0_73] : memref<2x10x10x128xf32, #tpu.memory_space<vmem>>, vector<2x8x8x128xf32>
    %70 = vector.shape_cast %69 : vector<2x8x8x128xf32> to vector<128x128xf32>
    %c0_74 = arith.constant 0 : index
    %c0_75 = arith.constant 0 : index
    %71 = vector.load %arg6[%c0_74, %c0_75] : memref<128x128xf32, #tpu.memory_space<vmem>>, vector<128x128xf32>
    %72 = arith.truncf %70 : vector<128x128xf32> to vector<128x128xbf16>
    %c0_76 = arith.constant 0 : index
    %c0_77 = arith.constant 0 : index
    %c0_78 = arith.constant 0 : index
    %73 = vector.load %arg1[%c0_76, %c0_77, %c0_78] : memref<9x128x128xbf16, #tpu.memory_space<vmem>>, vector<1x128x128xbf16>
    %74 = vector.shape_cast %73 : vector<1x128x128xbf16> to vector<128x128xbf16>
    %cst_79 = arith.constant dense<0.000000e+00> : vector<128x128xf32>
    %75 = tpu.matmul %72, %74, %cst_79 {dimension_numbers = #tpu.dot_dimension_numbers<[1], [0], [0], [1], [0, 0, 1, 1], [], []>} : vector<128x128xbf16>, vector<128x128xbf16>, vector<128x128xf32> -> vector<128x128xf32>
    %76 = arith.addf %71, %75 : vector<128x128xf32>
    %c0_80 = arith.constant 0 : index
    %c0_81 = arith.constant 0 : index
    %77 = vector.load %arg6[%c0_80, %c0_81] : memref<128x128xf32, #tpu.memory_space<vmem>>, vector<128x128xf32>
    tpu.vector_store %arg6[%c0_80, %c0_81], %76 {strides = array<i32>} : memref<128x128xf32, #tpu.memory_space<vmem>>, vector<128x128xf32>,
    %c0_82 = arith.constant 0 : index
    %c0_83 = arith.constant 0 : index
    %c1_84 = arith.constant 1 : index
    %c0_85 = arith.constant 0 : index
    %78 = vector.load %arg5[%c0_82, %c0_83, %c1_84, %c0_85] : memref<2x10x10x128xf32, #tpu.memory_space<vmem>>, vector<2x8x8x128xf32>
    %79 = vector.shape_cast %78 : vector<2x8x8x128xf32> to vector<128x128xf32>
    %c0_86 = arith.constant 0 : index
    %c0_87 = arith.constant 0 : index
    %80 = vector.load %arg6[%c0_86, %c0_87] : memref<128x128xf32, #tpu.memory_space<vmem>>, vector<128x128xf32>
    %81 = arith.truncf %79 : vector<128x128xf32> to vector<128x128xbf16>
    %c1_88 = arith.constant 1 : index
    %c0_89 = arith.constant 0 : index
    %c0_90 = arith.constant 0 : index
    %82 = vector.load %arg1[%c1_88, %c0_89, %c0_90] : memref<9x128x128xbf16, #tpu.memory_space<vmem>>, vector<1x128x128xbf16>
    %83 = vector.shape_cast %82 : vector<1x128x128xbf16> to vector<128x128xbf16>
    %cst_91 = arith.constant dense<0.000000e+00> : vector<128x128xf32>
    %84 = tpu.matmul %81, %83, %cst_91 {dimension_numbers = #tpu.dot_dimension_numbers<[1], [0], [0], [1], [0, 0, 1, 1], [], []>} : vector<128x128xbf16>, vector<128x128xbf16>, vector<128x128xf32> -> vector<128x128xf32>
    %85 = arith.addf %80, %84 : vector<128x128xf32>
    %c0_92 = arith.constant 0 : index
    %c0_93 = arith.constant 0 : index
    %86 = vector.load %arg6[%c0_92, %c0_93] : memref<128x128xf32, #tpu.memory_space<vmem>>, vector<128x128xf32>
    tpu.vector_store %arg6[%c0_92, %c0_93], %85 {strides = array<i32>} : memref<128x128xf32, #tpu.memory_space<vmem>>, vector<128x128xf32>,
    %c0_94 = arith.constant 0 : index
    %c0_95 = arith.constant 0 : index
    %c2 = arith.constant 2 : index
    %c0_96 = arith.constant 0 : index
    %87 = vector.load %arg5[%c0_94, %c0_95, %c2, %c0_96] : memref<2x10x10x128xf32, #tpu.memory_space<vmem>>, vector<2x8x8x128xf32>
    %88 = vector.shape_cast %87 : vector<2x8x8x128xf32> to vector<128x128xf32>
    %c0_97 = arith.constant 0 : index
    %c0_98 = arith.constant 0 : index
    %89 = vector.load %arg6[%c0_97, %c0_98] : memref<128x128xf32, #tpu.memory_space<vmem>>, vector<128x128xf32>
    %90 = arith.truncf %88 : vector<128x128xf32> to vector<128x128xbf16>
    %c2_99 = arith.constant 2 : index
    %c0_100 = arith.constant 0 : index
    %c0_101 = arith.constant 0 : index
    %91 = vector.load %arg1[%c2_99, %c0_100, %c0_101] : memref<9x128x128xbf16, #tpu.memory_space<vmem>>, vector<1x128x128xbf16>
    %92 = vector.shape_cast %91 : vector<1x128x128xbf16> to vector<128x128xbf16>
    %cst_102 = arith.constant dense<0.000000e+00> : vector<128x128xf32>
    %93 = tpu.matmul %90, %92, %cst_102 {dimension_numbers = #tpu.dot_dimension_numbers<[1], [0], [0], [1], [0, 0, 1, 1], [], []>} : vector<128x128xbf16>, vector<128x128xbf16>, vector<128x128xf32> -> vector<128x128xf32>
    %94 = arith.addf %89, %93 : vector<128x128xf32>
    %c0_103 = arith.constant 0 : index
    %c0_104 = arith.constant 0 : index
    %95 = vector.load %arg6[%c0_103, %c0_104] : memref<128x128xf32, #tpu.memory_space<vmem>>, vector<128x128xf32>
    tpu.vector_store %arg6[%c0_103, %c0_104], %94 {strides = array<i32>} : memref<128x128xf32, #tpu.memory_space<vmem>>, vector<128x128xf32>,
    %c0_105 = arith.constant 0 : index
    %c1_106 = arith.constant 1 : index
    %c0_107 = arith.constant 0 : index
    %c0_108 = arith.constant 0 : index
    %96 = vector.load %arg5[%c0_105, %c1_106, %c0_107, %c0_108] : memref<2x10x10x128xf32, #tpu.memory_space<vmem>>, vector<2x8x8x128xf32>
    %97 = vector.shape_cast %96 : vector<2x8x8x128xf32> to vector<128x128xf32>
    %c0_109 = arith.constant 0 : index
    %c0_110 = arith.constant 0 : index
    %98 = vector.load %arg6[%c0_109, %c0_110] : memref<128x128xf32, #tpu.memory_space<vmem>>, vector<128x128xf32>
    %99 = arith.truncf %97 : vector<128x128xf32> to vector<128x128xbf16>
    %c3_111 = arith.constant 3 : index
    %c0_112 = arith.constant 0 : index
    %c0_113 = arith.constant 0 : index
    %100 = vector.load %arg1[%c3_111, %c0_112, %c0_113] : memref<9x128x128xbf16, #tpu.memory_space<vmem>>, vector<1x128x128xbf16>
    %101 = vector.shape_cast %100 : vector<1x128x128xbf16> to vector<128x128xbf16>
    %cst_114 = arith.constant dense<0.000000e+00> : vector<128x128xf32>
    %102 = tpu.matmul %99, %101, %cst_114 {dimension_numbers = #tpu.dot_dimension_numbers<[1], [0], [0], [1], [0, 0, 1, 1], [], []>} : vector<128x128xbf16>, vector<128x128xbf16>, vector<128x128xf32> -> vector<128x128xf32>
    %103 = arith.addf %98, %102 : vector<128x128xf32>
    %c0_115 = arith.constant 0 : index
    %c0_116 = arith.constant 0 : index
    %104 = vector.load %arg6[%c0_115, %c0_116] : memref<128x128xf32, #tpu.memory_space<vmem>>, vector<128x128xf32>
    tpu.vector_store %arg6[%c0_115, %c0_116], %103 {strides = array<i32>} : memref<128x128xf32, #tpu.memory_space<vmem>>, vector<128x128xf32>,
    %c0_117 = arith.constant 0 : index
    %c1_118 = arith.constant 1 : index
    %c1_119 = arith.constant 1 : index
    %c0_120 = arith.constant 0 : index
    %105 = vector.load %arg5[%c0_117, %c1_118, %c1_119, %c0_120] : memref<2x10x10x128xf32, #tpu.memory_space<vmem>>, vector<2x8x8x128xf32>
    %106 = vector.shape_cast %105 : vector<2x8x8x128xf32> to vector<128x128xf32>
    %c0_121 = arith.constant 0 : index
    %c0_122 = arith.constant 0 : index
    %107 = vector.load %arg6[%c0_121, %c0_122] : memref<128x128xf32, #tpu.memory_space<vmem>>, vector<128x128xf32>
    %108 = arith.truncf %106 : vector<128x128xf32> to vector<128x128xbf16>
    %c4 = arith.constant 4 : index
    %c0_123 = arith.constant 0 : index
    %c0_124 = arith.constant 0 : index
    %109 = vector.load %arg1[%c4, %c0_123, %c0_124] : memref<9x128x128xbf16, #tpu.memory_space<vmem>>, vector<1x128x128xbf16>
    %110 = vector.shape_cast %109 : vector<1x128x128xbf16> to vector<128x128xbf16>
    %cst_125 = arith.constant dense<0.000000e+00> : vector<128x128xf32>
    %111 = tpu.matmul %108, %110, %cst_125 {dimension_numbers = #tpu.dot_dimension_numbers<[1], [0], [0], [1], [0, 0, 1, 1], [], []>} : vector<128x128xbf16>, vector<128x128xbf16>, vector<128x128xf32> -> vector<128x128xf32>
    %112 = arith.addf %107, %111 : vector<128x128xf32>
    %c0_126 = arith.constant 0 : index
    %c0_127 = arith.constant 0 : index
    %113 = vector.load %arg6[%c0_126, %c0_127] : memref<128x128xf32, #tpu.memory_space<vmem>>, vector<128x128xf32>
    tpu.vector_store %arg6[%c0_126, %c0_127], %112 {strides = array<i32>} : memref<128x128xf32, #tpu.memory_space<vmem>>, vector<128x128xf32>,
    %c0_128 = arith.constant 0 : index
    %c1_129 = arith.constant 1 : index
    %c2_130 = arith.constant 2 : index
    %c0_131 = arith.constant 0 : index
    %114 = vector.load %arg5[%c0_128, %c1_129, %c2_130, %c0_131] : memref<2x10x10x128xf32, #tpu.memory_space<vmem>>, vector<2x8x8x128xf32>
    %115 = vector.shape_cast %114 : vector<2x8x8x128xf32> to vector<128x128xf32>
    %c0_132 = arith.constant 0 : index
    %c0_133 = arith.constant 0 : index
    %116 = vector.load %arg6[%c0_132, %c0_133] : memref<128x128xf32, #tpu.memory_space<vmem>>, vector<128x128xf32>
    %117 = arith.truncf %115 : vector<128x128xf32> to vector<128x128xbf16>
    %c5_134 = arith.constant 5 : index
    %c0_135 = arith.constant 0 : index
    %c0_136 = arith.constant 0 : index
    %118 = vector.load %arg1[%c5_134, %c0_135, %c0_136] : memref<9x128x128xbf16, #tpu.memory_space<vmem>>, vector<1x128x128xbf16>
    %119 = vector.shape_cast %118 : vector<1x128x128xbf16> to vector<128x128xbf16>
    %cst_137 = arith.constant dense<0.000000e+00> : vector<128x128xf32>
    %120 = tpu.matmul %117, %119, %cst_137 {dimension_numbers = #tpu.dot_dimension_numbers<[1], [0], [0], [1], [0, 0, 1, 1], [], []>} : vector<128x128xbf16>, vector<128x128xbf16>, vector<128x128xf32> -> vector<128x128xf32>
    %121 = arith.addf %116, %120 : vector<128x128xf32>
    %c0_138 = arith.constant 0 : index
    %c0_139 = arith.constant 0 : index
    %122 = vector.load %arg6[%c0_138, %c0_139] : memref<128x128xf32, #tpu.memory_space<vmem>>, vector<128x128xf32>
    tpu.vector_store %arg6[%c0_138, %c0_139], %121 {strides = array<i32>} : memref<128x128xf32, #tpu.memory_space<vmem>>, vector<128x128xf32>,
    %c0_140 = arith.constant 0 : index
    %c2_141 = arith.constant 2 : index
    %c0_142 = arith.constant 0 : index
    %c0_143 = arith.constant 0 : index
    %123 = vector.load %arg5[%c0_140, %c2_141, %c0_142, %c0_143] : memref<2x10x10x128xf32, #tpu.memory_space<vmem>>, vector<2x8x8x128xf32>
    %124 = vector.shape_cast %123 : vector<2x8x8x128xf32> to vector<128x128xf32>
    %c0_144 = arith.constant 0 : index
    %c0_145 = arith.constant 0 : index
    %125 = vector.load %arg6[%c0_144, %c0_145] : memref<128x128xf32, #tpu.memory_space<vmem>>, vector<128x128xf32>
    %126 = arith.truncf %124 : vector<128x128xf32> to vector<128x128xbf16>
    %c6 = arith.constant 6 : index
    %c0_146 = arith.constant 0 : index
    %c0_147 = arith.constant 0 : index
    %127 = vector.load %arg1[%c6, %c0_146, %c0_147] : memref<9x128x128xbf16, #tpu.memory_space<vmem>>, vector<1x128x128xbf16>
    %128 = vector.shape_cast %127 : vector<1x128x128xbf16> to vector<128x128xbf16>
    %cst_148 = arith.constant dense<0.000000e+00> : vector<128x128xf32>
    %129 = tpu.matmul %126, %128, %cst_148 {dimension_numbers = #tpu.dot_dimension_numbers<[1], [0], [0], [1], [0, 0, 1, 1], [], []>} : vector<128x128xbf16>, vector<128x128xbf16>, vector<128x128xf32> -> vector<128x128xf32>
    %130 = arith.addf %125, %129 : vector<128x128xf32>
    %c0_149 = arith.constant 0 : index
    %c0_150 = arith.constant 0 : index
    %131 = vector.load %arg6[%c0_149, %c0_150] : memref<128x128xf32, #tpu.memory_space<vmem>>, vector<128x128xf32>
    tpu.vector_store %arg6[%c0_149, %c0_150], %130 {strides = array<i32>} : memref<128x128xf32, #tpu.memory_space<vmem>>, vector<128x128xf32>,
    %c0_151 = arith.constant 0 : index
    %c2_152 = arith.constant 2 : index
    %c1_153 = arith.constant 1 : index
    %c0_154 = arith.constant 0 : index
    %132 = vector.load %arg5[%c0_151, %c2_152, %c1_153, %c0_154] : memref<2x10x10x128xf32, #tpu.memory_space<vmem>>, vector<2x8x8x128xf32>
    %133 = vector.shape_cast %132 : vector<2x8x8x128xf32> to vector<128x128xf32>
    %c0_155 = arith.constant 0 : index
    %c0_156 = arith.constant 0 : index
    %134 = vector.load %arg6[%c0_155, %c0_156] : memref<128x128xf32, #tpu.memory_space<vmem>>, vector<128x128xf32>
    %135 = arith.truncf %133 : vector<128x128xf32> to vector<128x128xbf16>
    %c7_157 = arith.constant 7 : index
    %c0_158 = arith.constant 0 : index
    %c0_159 = arith.constant 0 : index
    %136 = vector.load %arg1[%c7_157, %c0_158, %c0_159] : memref<9x128x128xbf16, #tpu.memory_space<vmem>>, vector<1x128x128xbf16>
    %137 = vector.shape_cast %136 : vector<1x128x128xbf16> to vector<128x128xbf16>
    %cst_160 = arith.constant dense<0.000000e+00> : vector<128x128xf32>
    %138 = tpu.matmul %135, %137, %cst_160 {dimension_numbers = #tpu.dot_dimension_numbers<[1], [0], [0], [1], [0, 0, 1, 1], [], []>} : vector<128x128xbf16>, vector<128x128xbf16>, vector<128x128xf32> -> vector<128x128xf32>
    %139 = arith.addf %134, %138 : vector<128x128xf32>
    %c0_161 = arith.constant 0 : index
    %c0_162 = arith.constant 0 : index
    %140 = vector.load %arg6[%c0_161, %c0_162] : memref<128x128xf32, #tpu.memory_space<vmem>>, vector<128x128xf32>
    tpu.vector_store %arg6[%c0_161, %c0_162], %139 {strides = array<i32>} : memref<128x128xf32, #tpu.memory_space<vmem>>, vector<128x128xf32>,
    %c0_163 = arith.constant 0 : index
    %c2_164 = arith.constant 2 : index
    %c2_165 = arith.constant 2 : index
    %c0_166 = arith.constant 0 : index
    %141 = vector.load %arg5[%c0_163, %c2_164, %c2_165, %c0_166] : memref<2x10x10x128xf32, #tpu.memory_space<vmem>>, vector<2x8x8x128xf32>
    %142 = vector.shape_cast %141 : vector<2x8x8x128xf32> to vector<128x128xf32>
    %c0_167 = arith.constant 0 : index
    %c0_168 = arith.constant 0 : index
    %143 = vector.load %arg6[%c0_167, %c0_168] : memref<128x128xf32, #tpu.memory_space<vmem>>, vector<128x128xf32>
    %144 = arith.truncf %142 : vector<128x128xf32> to vector<128x128xbf16>
    %c8 = arith.constant 8 : index
    %c0_169 = arith.constant 0 : index
    %c0_170 = arith.constant 0 : index
    %145 = vector.load %arg1[%c8, %c0_169, %c0_170] : memref<9x128x128xbf16, #tpu.memory_space<vmem>>, vector<1x128x128xbf16>
    %146 = vector.shape_cast %145 : vector<1x128x128xbf16> to vector<128x128xbf16>
    %cst_171 = arith.constant dense<0.000000e+00> : vector<128x128xf32>
    %147 = tpu.matmul %144, %146, %cst_171 {dimension_numbers = #tpu.dot_dimension_numbers<[1], [0], [0], [1], [0, 0, 1, 1], [], []>} : vector<128x128xbf16>, vector<128x128xbf16>, vector<128x128xf32> -> vector<128x128xf32>
    %148 = arith.addf %143, %147 : vector<128x128xf32>
    %c0_172 = arith.constant 0 : index
    %c0_173 = arith.constant 0 : index
    %149 = vector.load %arg6[%c0_172, %c0_173] : memref<128x128xf32, #tpu.memory_space<vmem>>, vector<128x128xf32>
    tpu.vector_store %arg6[%c0_172, %c0_173], %148 {strides = array<i32>} : memref<128x128xf32, #tpu.memory_space<vmem>>, vector<128x128xf32>,
    %c0_174 = arith.constant 0 : index
    %c0_175 = arith.constant 0 : index
    %150 = vector.load %arg6[%c0_174, %c0_175] : memref<128x128xf32, #tpu.memory_space<vmem>>, vector<128x128xf32>
    %cst_176 = arith.constant dense<0.000000e+00> : vector<128xf32>
    %151 = vector.multi_reduction <add>, %150, %cst_176 [0] : vector<128x128xf32> to vector<128xf32>
    %152 = vector.shape_cast %151 : vector<128xf32> to vector<1x128xf32>
    %cst_177 = arith.constant 7.812500e-03 : f32
    %153 = vector.broadcast %cst_177 : f32 to vector<1x128xf32>
    %154 = arith.mulf %152, %153 : vector<1x128xf32>
    %155 = vector.broadcast %154 : vector<1x128xf32> to vector<128x128xf32>
    %156 = arith.subf %150, %155 : vector<128x128xf32>
    %157 = arith.mulf %156, %156 : vector<128x128xf32>
    %cst_178 = arith.constant dense<0.000000e+00> : vector<128xf32>
    %158 = vector.multi_reduction <add>, %157, %cst_178 [0] : vector<128x128xf32> to vector<128xf32>
    %159 = vector.shape_cast %158 : vector<128xf32> to vector<1x128xf32>
    %cst_179 = arith.constant 7.812500e-03 : f32
    %160 = vector.broadcast %cst_179 : f32 to vector<1x128xf32>
    %161 = arith.mulf %159, %160 : vector<1x128xf32>
    %cst_180 = arith.constant 9.99999974E-6 : f32
    %162 = vector.broadcast %cst_180 : f32 to vector<1x128xf32>
    %163 = arith.addf %161, %162 : vector<1x128xf32>
    %164 = math.rsqrt %163 : vector<1x128xf32>
    %c0_181 = arith.constant 0 : index
    %c0_182 = arith.constant 0 : index
    %165 = vector.load %arg2[%c0_181, %c0_182] : memref<1x128xf32, #tpu.memory_space<vmem>>, vector<1x128xf32>
    %166 = arith.mulf %164, %165 : vector<1x128xf32>
    %c0_183 = arith.constant 0 : index
    %c0_184 = arith.constant 0 : index
    %167 = vector.load %arg3[%c0_183, %c0_184] : memref<1x128xf32, #tpu.memory_space<vmem>>, vector<1x128xf32>
    %168 = arith.mulf %154, %166 : vector<1x128xf32>
    %169 = arith.subf %167, %168 : vector<1x128xf32>
    %170 = vector.broadcast %166 : vector<1x128xf32> to vector<128x128xf32>
    %171 = arith.mulf %150, %170 : vector<128x128xf32>
    %172 = vector.broadcast %169 : vector<1x128xf32> to vector<128x128xf32>
    %173 = arith.addf %171, %172 : vector<128x128xf32>
    %cst_185 = arith.constant 0.000000e+00 : f32
    %174 = vector.broadcast %cst_185 : f32 to vector<128x128xf32>
    %175 = arith.maximumf %173, %174 : vector<128x128xf32>
    %c0_186 = arith.constant 0 : index
    %c0_187 = arith.constant 0 : index
    %176 = vector.load %arg4[%c0_186, %c0_187] : memref<128x128xf32, #tpu.memory_space<vmem>>, vector<128x128xf32>
    tpu.vector_store %arg4[%c0_186, %c0_187], %175 {strides = array<i32>} : memref<128x128xf32, #tpu.memory_space<vmem>>, vector<128x128xf32>,
    return
  }
}

</mosaic_0001>

<llo_original>
// kernel: tpu_custom_call.1
$region0: #{tpu_custom_call.1}
  #allocation0 [shape = 'u32[]', space=smem, size = 0x4, offset = 0x4, fixed_abs, tag = 'smem constant byte address 0x4 - core index']
  #allocation1 [shape = 'u32[72,128]{1,0:T(1,128)}', space=vmem, size = 0x9000, scoped, tag = 'internal scratch']
  #allocation2 [shape = 'f32[2,10,10,128]{3,2,1,0:T(8,128)}', space=vmem, size = 0x28000, scoped, tag = 'scratch operand']
  #allocation3 [shape = 'f32[128,128]{1,0:T(8,128)}', space=vmem, size = 0x10000, scoped, tag = 'scratch operand']
  %s0 = inlined_call_operand.hbm [shape: f32[2,4,4,128], index: 0, kind: input, shape index: {}]
  %s1 = inlined_call_operand.hbm [shape: bf16[9,128,128], index: 1, kind: input, shape index: {}]
  %s2 = inlined_call_operand.vmem [shape: f32[1,128], index: 2, kind: input, shape index: {}]
  %s3 = inlined_call_operand.vmem [shape: f32[1,128], index: 3, kind: input, shape index: {}]
  %s4 = inlined_call_operand.hbm [shape: f32[128,128], index: 4, kind: output, shape index: {}]
  %s5 = sld [smem:[#allocation0]]
  $region34: #{tpu_custom_call.1} parent=0
    _
  %s7 = ssub.s32 1, %s5
  %s8 = scalar_select 0, %s7, %s5
  $region1: #{tpu_custom_call.1} parent=0
    #allocation4 [shape = 'u8[16384]{0}', space=vmem, size = 0x4000, scoped, tag = 'input window, operand 0, single buffered']
    #allocation5 [shape = 's32[1]{0}', space=sflag, size = 0x4, scoped, tag = 'scoped memory for tpu_custom_call.1']
    #allocation6 [shape = 's32[1]{0}', space=sflag, size = 0x4, scoped, tag = 'scoped memory for tpu_custom_call.1']
    #allocation7 [shape = 'u8[294912]{0}', space=vmem, size = 0x48000, scoped, tag = 'input window, operand 1, single buffered']
    #allocation8 [shape = 's32[1]{0}', space=sflag, size = 0x4, scoped, tag = 'scoped memory for tpu_custom_call.1']
    #allocation9 [shape = 'u8[65536]{0}', space=vmem, size = 0x10000, scoped, tag = 'output window, operand 0, single buffered']
    %9 = vsyncpa [#allocation5], 0
    %10 = vsyncpa [#allocation8], 0
    %11 = vsyncpa [#allocation6], 0
    // Predicated region
    $region2: #{tpu_custom_call.1} parent=1 // pred_check
      _
    $region3: #{tpu_custom_call.1} parent=1 // pred_check_branch
      %13 = sbr.rel (0) target = $region5
    $region4: #{tpu_custom_call.1} parent=1 // pred_region
      %15 = vsyncadd [#allocation5], 0
      %s16 = sshll.u32 %s0, 4
      %s17 = int_to_ptr.hbm [resolvable:$true] %s16
      %s18 = sshll.u32 [#allocation4], 4
      %s19 = int_to_ptr.vmem [resolvable:$true] %s18
      %24 = dma.hbm_to_vmem [thread:$0]  %s17, 512, %s19, [#allocation5], 64, 64, 4
    $region5: #{tpu_custom_call.1} parent=1 // pred_fallthru
      _
    // Predicated region
    $region6: #{tpu_custom_call.1} parent=1 // pred_check
      _
    $region7: #{tpu_custom_call.1} parent=1 // pred_check_branch
      %26 = sbr.rel (0) target = $region9
    $region8: #{tpu_custom_call.1} parent=1 // pred_region
      %28 = vsyncadd [#allocation8], 0
      %s29 = sshll.u32 %s1, 4
      %s30 = int_to_ptr.hbm [resolvable:$true] %s29
      %s31 = sshll.u32 [#allocation7], 4
      %s32 = int_to_ptr.vmem [resolvable:$true] %s31
      %37 = dma.hbm_to_vmem [thread:$0]  %s30, 9216, %s32, [#allocation8], 64, 64, 4
    $region9: #{tpu_custom_call.1} parent=1 // pred_fallthru
      _
    // Predicated region
    $region10: #{tpu_custom_call.1} parent=1 // pred_check
      _
    $region11: #{tpu_custom_call.1} parent=1 // pred_check_branch
      %39 = sbr.rel (0) target = $region13
    $region12: #{tpu_custom_call.1} parent=1 // pred_region
      _
    $region13: #{tpu_custom_call.1} parent=1 // pred_fallthru
      _
    // Predicated region
    $region14: #{tpu_custom_call.1} parent=1 // pred_check
      _
    $region15: #{tpu_custom_call.1} parent=1 // pred_check_branch
      %41 = sbr.rel (0) target = $region17
    $region16: #{tpu_custom_call.1} parent=1 // pred_region
      _
    $region17: #{tpu_custom_call.1} parent=1 // pred_fallthru
      _
    // Predicated region
    $region18: #{tpu_custom_call.1} parent=1 // pred_check
      _
    $region19: #{tpu_custom_call.1} parent=1 // pred_check_branch
      %43 = sbr.rel (0) target = $region21
    $region20: #{tpu_custom_call.1} parent=1 // pred_region
      %45 = dma.done [#allocation5], 512
    $region21: #{tpu_custom_call.1} parent=1 // pred_fallthru
      _
    // Predicated region
    $region22: #{tpu_custom_call.1} parent=1 // pred_check
      _
    $region23: #{tpu_custom_call.1} parent=1 // pred_check_branch
      %47 = sbr.rel (0) target = $region25
    $region24: #{tpu_custom_call.1} parent=1 // pred_region
      %49 = dma.done [#allocation8], 9216
    $region25: #{tpu_custom_call.1} parent=1 // pred_fallthru
      _
    %50 = vst [vmem:[#allocation2] sm:$0xff] 0.0
    %51 = vst [vmem:[#allocation2 + $0x8] sm:$0x3] 0.0
    %52 = vst [vmem:[#allocation2 + $0x10] sm:$0xff] 0.0
    %53 = vst [vmem:[#allocation2 + $0x18] sm:$0x3] 0.0
    %54 = vst [vmem:[#allocation2 + $0x20] sm:$0xff] 0.0
    %55 = vst [vmem:[#allocation2 + $0x28] sm:$0x3] 0.0
    %56 = vst [vmem:[#allocation2 + $0x30] sm:$0xff] 0.0
    %57 = vst [vmem:[#allocation2 + $0x38] sm:$0x3] 0.0
    %58 = vst [vmem:[#allocation2 + $0x40] sm:$0xff] 0.0
    %59 = vst [vmem:[#allocation2 + $0x48] sm:$0x3] 0.0
    %60 = vst [vmem:[#allocation2 + $0x50] sm:$0xff] 0.0
    %61 = vst [vmem:[#allocation2 + $0x58] sm:$0x3] 0.0
    %62 = vst [vmem:[#allocation2 + $0x60] sm:$0xff] 0.0
    %63 = vst [vmem:[#allocation2 + $0x68] sm:$0x3] 0.0
    %64 = vst [vmem:[#allocation2 + $0x70] sm:$0xff] 0.0
    %65 = vst [vmem:[#allocation2 + $0x78] sm:$0x3] 0.0
    %66 = vst [vmem:[#allocation2 + $0x80] sm:$0xff] 0.0
    %67 = vst [vmem:[#allocation2 + $0x88] sm:$0x3] 0.0
    %68 = vst [vmem:[#allocation2 + $0x90] sm:$0xff] 0.0
    %69 = vst [vmem:[#allocation2 + $0x98] sm:$0x3] 0.0
    %70 = vst [vmem:[#allocation2 + $0xa0] sm:$0xff] 0.0
    %71 = vst [vmem:[#allocation2 + $0xa8] sm:$0x3] 0.0
    %72 = vst [vmem:[#allocation2 + $0xb0] sm:$0xff] 0.0
    %73 = vst [vmem:[#allocation2 + $0xb8] sm:$0x3] 0.0
    %74 = vst [vmem:[#allocation2 + $0xc0] sm:$0xff] 0.0
    %75 = vst [vmem:[#allocation2 + $0xc8] sm:$0x3] 0.0
    %76 = vst [vmem:[#allocation2 + $0xd0] sm:$0xff] 0.0
    %77 = vst [vmem:[#allocation2 + $0xd8] sm:$0x3] 0.0
    %78 = vst [vmem:[#allocation2 + $0xe0] sm:$0xff] 0.0
    %79 = vst [vmem:[#allocation2 + $0xe8] sm:$0x3] 0.0
    %80 = vst [vmem:[#allocation2 + $0xf0] sm:$0xff] 0.0
    %81 = vst [vmem:[#allocation2 + $0xf8] sm:$0x3] 0.0
    %82 = vst [vmem:[#allocation2 + $0x100] sm:$0xff] 0.0
    %83 = vst [vmem:[#allocation2 + $0x108] sm:$0x3] 0.0
    %84 = vst [vmem:[#allocation2 + $0x110] sm:$0xff] 0.0
    %85 = vst [vmem:[#allocation2 + $0x118] sm:$0x3] 0.0
    %86 = vst [vmem:[#allocation2 + $0x120] sm:$0xff] 0.0
    %87 = vst [vmem:[#allocation2 + $0x128] sm:$0x3] 0.0
    %88 = vst [vmem:[#allocation2 + $0x130] sm:$0xff] 0.0
    %89 = vst [vmem:[#allocation2 + $0x138] sm:$0x3] 0.0
    %v90 = vld [vmem:[#allocation4] sm:$0xf]
    %v91 = vld [vmem:[#allocation4 + $0x4] sm:$0xf]
    %v92 = vld [vmem:[#allocation4 + $0x8] sm:$0xf]
    %v93 = vld [vmem:[#allocation4 + $0xc] sm:$0xf]
    %v94 = vld [vmem:[#allocation4 + $0x10] sm:$0xf]
    %v95 = vld [vmem:[#allocation4 + $0x14] sm:$0xf]
    %v96 = vld [vmem:[#allocation4 + $0x18] sm:$0xf]
    %v97 = vld [vmem:[#allocation4 + $0x1c] sm:$0xf]
    %v98 = vperm.slane %v90, 0
    %v99 = vperm.slane %v94, 0
    %s100 = scalar_lea.vmem [#allocation2], 16
    %101 = vst [vmem:[%s100 + $0x1] sm:$0x3] %v98
    %102 = vst [vmem:[%s100 + $0x11] sm:$0x3] %v98
    %103 = vst [vmem:[%s100 + $0xa1] sm:$0x3] %v99
    %104 = vst [vmem:[%s100 + $0xb1] sm:$0x3] %v99
    %v105 = vperm.slane %v90, 1
    %v106 = vperm.slane %v94, 1
    %107 = vst [vmem:[%s100 + $0x3] sm:$0x3] %v105
    %108 = vst [vmem:[%s100 + $0x13] sm:$0x3] %v105
    %109 = vst [vmem:[%s100 + $0xa3] sm:$0x3] %v106
    %110 = vst [vmem:[%s100 + $0xb3] sm:$0x3] %v106
    %v111 = vperm.slane %v90, 2
    %v112 = vperm.slane %v94, 2
    %113 = vst [vmem:[%s100 + $0x5] sm:$0x3] %v111
    %114 = vst [vmem:[%s100 + $0x15] sm:$0x3] %v111
    %115 = vst [vmem:[%s100 + $0xa5] sm:$0x3] %v112
    %116 = vst [vmem:[%s100 + $0xb5] sm:$0x3] %v112
    %v117 = vperm.slane %v90, 3
    %v118 = vperm.slane %v94, 3
    %119 = vst [vmem:[%s100 + $0x7] sm:$0x3] %v117
    %120 = vst [vmem:[%s100 + $0x17] sm:$0x3] %v117
    %121 = vst [vmem:[%s100 + $0xa7] sm:$0x3] %v118
    %122 = vst [vmem:[%s100 + $0xb7] sm:$0x3] %v118
    %v123 = vperm.slane %v91, 0
    %v124 = vperm.slane %v95, 0
    %s125 = scalar_lea.vmem [#allocation2], 48
    %126 = vst [vmem:[%s125 + $0x1] sm:$0x3] %v123
    %127 = vst [vmem:[%s125 + $0x11] sm:$0x3] %v123
    %128 = vst [vmem:[%s125 + $0xa1] sm:$0x3] %v124
    %129 = vst [vmem:[%s125 + $0xb1] sm:$0x3] %v124
    %v130 = vperm.slane %v91, 1
    %v131 = vperm.slane %v95, 1
    %132 = vst [vmem:[%s125 + $0x3] sm:$0x3] %v130
    %133 = vst [vmem:[%s125 + $0x13] sm:$0x3] %v130
    %134 = vst [vmem:[%s125 + $0xa3] sm:$0x3] %v131
    %135 = vst [vmem:[%s125 + $0xb3] sm:$0x3] %v131
    %v136 = vperm.slane %v91, 2
    %v137 = vperm.slane %v95, 2
    %138 = vst [vmem:[%s125 + $0x5] sm:$0x3] %v136
    %139 = vst [vmem:[%s125 + $0x15] sm:$0x3] %v136
    %140 = vst [vmem:[%s125 + $0xa5] sm:$0x3] %v137
    %141 = vst [vmem:[%s125 + $0xb5] sm:$0x3] %v137
    %v142 = vperm.slane %v91, 3
    %v143 = vperm.slane %v95, 3
    %144 = vst [vmem:[%s125 + $0x7] sm:$0x3] %v142
    %145 = vst [vmem:[%s125 + $0x17] sm:$0x3] %v142
    %146 = vst [vmem:[%s125 + $0xa7] sm:$0x3] %v143
    %147 = vst [vmem:[%s125 + $0xb7] sm:$0x3] %v143
    %v148 = vperm.slane %v92, 0
    %v149 = vperm.slane %v96, 0
    %s150 = scalar_lea.vmem [#allocation2], 80
    %151 = vst [vmem:[%s150 + $0x1] sm:$0x3] %v148
    %152 = vst [vmem:[%s150 + $0x11] sm:$0x3] %v148
    %153 = vst [vmem:[%s150 + $0xa1] sm:$0x3] %v149
    %154 = vst [vmem:[%s150 + $0xb1] sm:$0x3] %v149
    %v155 = vperm.slane %v92, 1
    %v156 = vperm.slane %v96, 1
    %157 = vst [vmem:[%s150 + $0x3] sm:$0x3] %v155
    %158 = vst [vmem:[%s150 + $0x13] sm:$0x3] %v155
    %159 = vst [vmem:[%s150 + $0xa3] sm:$0x3] %v156
    %160 = vst [vmem:[%s150 + $0xb3] sm:$0x3] %v156
    %v161 = vperm.slane %v92, 2
    %v162 = vperm.slane %v96, 2
    %163 = vst [vmem:[%s150 + $0x5] sm:$0x3] %v161
    %164 = vst [vmem:[%s150 + $0x15] sm:$0x3] %v161
    %165 = vst [vmem:[%s150 + $0xa5] sm:$0x3] %v162
    %166 = vst [vmem:[%s150 + $0xb5] sm:$0x3] %v162
    %v167 = vperm.slane %v92, 3
    %v168 = vperm.slane %v96, 3
    %169 = vst [vmem:[%s150 + $0x7] sm:$0x3] %v167
    %170 = vst [vmem:[%s150 + $0x17] sm:$0x3] %v167
    %171 = vst [vmem:[%s150 + $0xa7] sm:$0x3] %v168
    %172 = vst [vmem:[%s150 + $0xb7] sm:$0x3] %v168
    %v173 = vperm.slane %v93, 0
    %v174 = vperm.slane %v97, 0
    %s175 = scalar_lea.vmem [#allocation2], 112
    %176 = vst [vmem:[%s175 + $0x1] sm:$0x3] %v173
    %177 = vst [vmem:[%s175 + $0x11] sm:$0x3] %v173
    %178 = vst [vmem:[%s175 + $0xa1] sm:$0x3] %v174
    %179 = vst [vmem:[%s175 + $0xb1] sm:$0x3] %v174
    %v180 = vperm.slane %v93, 1
    %v181 = vperm.slane %v97, 1
    %182 = vst [vmem:[%s175 + $0x3] sm:$0x3] %v180
    %183 = vst [vmem:[%s175 + $0x13] sm:$0x3] %v180
    %184 = vst [vmem:[%s175 + $0xa3] sm:$0x3] %v181
    %185 = vst [vmem:[%s175 + $0xb3] sm:$0x3] %v181
    %v186 = vperm.slane %v93, 2
    %v187 = vperm.slane %v97, 2
    %188 = vst [vmem:[%s175 + $0x5] sm:$0x3] %v186
    %189 = vst [vmem:[%s175 + $0x15] sm:$0x3] %v186
    %190 = vst [vmem:[%s175 + $0xa5] sm:$0x3] %v187
    %191 = vst [vmem:[%s175 + $0xb5] sm:$0x3] %v187
    %v192 = vperm.slane %v93, 3
    %v193 = vperm.slane %v97, 3
    %194 = vst [vmem:[%s175 + $0x7] sm:$0x3] %v192
    %195 = vst [vmem:[%s175 + $0x17] sm:$0x3] %v192
    %196 = vst [vmem:[%s175 + $0xa7] sm:$0x3] %v193
    %197 = vst [vmem:[%s175 + $0xb7] sm:$0x3] %v193
    %198 = vst [vmem:[#allocation3] sm:$0xff] 0.0
    %199 = vst [vmem:[#allocation3 + $0x8] sm:$0xff] 0.0
    %200 = vst [vmem:[#allocation3 + $0x10] sm:$0xff] 0.0
    %201 = vst [vmem:[#allocation3 + $0x18] sm:$0xff] 0.0
    %202 = vst [vmem:[#allocation3 + $0x20] sm:$0xff] 0.0
    %203 = vst [vmem:[#allocation3 + $0x28] sm:$0xff] 0.0
    %204 = vst [vmem:[#allocation3 + $0x30] sm:$0xff] 0.0
    %205 = vst [vmem:[#allocation3 + $0x38] sm:$0xff] 0.0
    %206 = vst [vmem:[#allocation3 + $0x40] sm:$0xff] 0.0
    %207 = vst [vmem:[#allocation3 + $0x48] sm:$0xff] 0.0
    %208 = vst [vmem:[#allocation3 + $0x50] sm:$0xff] 0.0
    %209 = vst [vmem:[#allocation3 + $0x58] sm:$0xff] 0.0
    %210 = vst [vmem:[#allocation3 + $0x60] sm:$0xff] 0.0
    %211 = vst [vmem:[#allocation3 + $0x68] sm:$0xff] 0.0
    %212 = vst [vmem:[#allocation3 + $0x70] sm:$0xff] 0.0
    %213 = vst [vmem:[#allocation3 + $0x78] sm:$0xff] 0.0
    %v214 = vld [vmem:[#allocation2] sm:$0xff]
    %v215 = vld [vmem:[#allocation2 + $0x10] sm:$0xff]
    %v216 = vld [vmem:[#allocation2 + $0x20] sm:$0xff]
    %v217 = vld [vmem:[#allocation2 + $0x30] sm:$0xff]
    %v218 = vld [vmem:[#allocation2 + $0x40] sm:$0xff]
    %v219 = vld [vmem:[#allocation2 + $0x50] sm:$0xff]
    %v220 = vld [vmem:[#allocation2 + $0x60] sm:$0xff]
    %v221 = vld [vmem:[#allocation2 + $0x70] sm:$0xff]
    %v222 = vld [vmem:[#allocation2 + $0xa0] sm:$0xff]
    %v223 = vld [vmem:[#allocation2 + $0xb0] sm:$0xff]
    %v224 = vld [vmem:[#allocation2 + $0xc0] sm:$0xff]
    %v225 = vld [vmem:[#allocation2 + $0xd0] sm:$0xff]
    %v226 = vld [vmem:[#allocation2 + $0xe0] sm:$0xff]
    %v227 = vld [vmem:[#allocation2 + $0xf0] sm:$0xff]
    %v228 = vld [vmem:[#allocation2 + $0x100] sm:$0xff]
    %v229 = vld [vmem:[#allocation2 + $0x110] sm:$0xff]
    %v230 = vld [vmem:[#allocation3] sm:$0xff]
    %v231 = vld [vmem:[#allocation3 + $0x8] sm:$0xff]
    %v232 = vld [vmem:[#allocation3 + $0x10] sm:$0xff]
    %v233 = vld [vmem:[#allocation3 + $0x18] sm:$0xff]
    %v234 = vld [vmem:[#allocation3 + $0x20] sm:$0xff]
    %v235 = vld [vmem:[#allocation3 + $0x28] sm:$0xff]
    %v236 = vld [vmem:[#allocation3 + $0x30] sm:$0xff]
    %v237 = vld [vmem:[#allocation3 + $0x38] sm:$0xff]
    %v238 = vld [vmem:[#allocation3 + $0x40] sm:$0xff]
    %v239 = vld [vmem:[#allocation3 + $0x48] sm:$0xff]
    %v240 = vld [vmem:[#allocation3 + $0x50] sm:$0xff]
    %v241 = vld [vmem:[#allocation3 + $0x58] sm:$0xff]
    %v242 = vld [vmem:[#allocation3 + $0x60] sm:$0xff]
    %v243 = vld [vmem:[#allocation3 + $0x68] sm:$0xff]
    %v244 = vld [vmem:[#allocation3 + $0x70] sm:$0xff]
    %v245 = vld [vmem:[#allocation3 + $0x78] sm:$0xff]
    %v246 = vpack.c.bf16 %v215, %v214
    %v247 = vpack.c.bf16 %v217, %v216
    %v248 = vpack.c.bf16 %v219, %v218
    %v249 = vpack.c.bf16 %v221, %v220
    %v250 = vpack.c.bf16 %v223, %v222
    %v251 = vpack.c.bf16 %v225, %v224
    %v252 = vpack.c.bf16 %v227, %v226
    %v253 = vpack.c.bf16 %v229, %v228
    %v254 = vld [vmem:[#allocation7] sm:$0xf]
    %v255 = vld [vmem:[#allocation7 + $0x4] sm:$0xf]
    %v256 = vld [vmem:[#allocation7 + $0x8] sm:$0xf]
    %v257 = vld [vmem:[#allocation7 + $0xc] sm:$0xf]
    %v258 = vld [vmem:[#allocation7 + $0x10] sm:$0xf]
    %v259 = vld [vmem:[#allocation7 + $0x14] sm:$0xf]
    %v260 = vld [vmem:[#allocation7 + $0x18] sm:$0xf]
    %v261 = vld [vmem:[#allocation7 + $0x1c] sm:$0xf]
    %v262 = vld [vmem:[#allocation7 + $0x20] sm:$0xf]
    %v263 = vld [vmem:[#allocation7 + $0x24] sm:$0xf]
    %v264 = vld [vmem:[#allocation7 + $0x28] sm:$0xf]
    %v265 = vld [vmem:[#allocation7 + $0x2c] sm:$0xf]
    %v266 = vld [vmem:[#allocation7 + $0x30] sm:$0xf]
    %v267 = vld [vmem:[#allocation7 + $0x34] sm:$0xf]
    %v268 = vld [vmem:[#allocation7 + $0x38] sm:$0xf]
    %v269 = vld [vmem:[#allocation7 + $0x3c] sm:$0xf]
    %v286 = vunpack.c.l.b16 %v254
    %v287 = vunpack.c.l.b16 %v255
    %v288 = vunpack.c.l.b16 %v256
    %v289 = vunpack.c.l.b16 %v257
    %v290 = vunpack.c.l.b16 %v258
    %v291 = vunpack.c.l.b16 %v259
    %v292 = vunpack.c.l.b16 %v260
    %v293 = vunpack.c.l.b16 %v261
    %v294 = vunpack.c.l.b16 %v262
    %v295 = vunpack.c.l.b16 %v263
    %v296 = vunpack.c.l.b16 %v264
    %v297 = vunpack.c.l.b16 %v265
    %v298 = vunpack.c.l.b16 %v266
    %v299 = vunpack.c.l.b16 %v267
    %v300 = vunpack.c.l.b16 %v268
    %v301 = vunpack.c.l.b16 %v269
    %v302 = vpack.c.b16 %v287, %v286
    %v303 = vpack.c.b16 %v289, %v288
    %v304 = vpack.c.b16 %v291, %v290
    %v305 = vpack.c.b16 %v293, %v292
    %v306 = vpack.c.b16 %v295, %v294
    %v307 = vpack.c.b16 %v297, %v296
    %v308 = vpack.c.b16 %v299, %v298
    %v309 = vpack.c.b16 %v301, %v300
    %318 = vmatpush.bf16.msra.mxu0 %v309
    %319 = vmatpush.bf16.msra.mxu0 %v308
    %320 = vmatpush.bf16.msra.mxu0 %v307
    %321 = vmatpush.bf16.msra.mxu0 %v306
    %322 = vmatpush.bf16.msra.mxu0 %v305
    %323 = vmatpush.bf16.msra.mxu0 %v304
    %324 = vmatpush.bf16.msra.mxu0 %v303
    %325 = vmatpush.bf16.msra.mxu0 %v302
    %326 = vmatmul.bf16.gmra.mxu0 %v246
    %v327 = vpop.f32.mrf.mxu0
    %v328 = vadd.f32 0.0, %v327
    %v329 = vpop.f32.mrf.mxu0
    %v330 = vadd.f32 0.0, %v329
    %331 = vmatmul.bf16.gmra.mxu0 %v247
    %v332 = vpop.f32.mrf.mxu0
    %v333 = vadd.f32 0.0, %v332
    %v334 = vpop.f32.mrf.mxu0
    %v335 = vadd.f32 0.0, %v334
    %336 = vmatmul.bf16.gmra.mxu0 %v248
    %v337 = vpop.f32.mrf.mxu0
    %v338 = vadd.f32 0.0, %v337
    %v339 = vpop.f32.mrf.mxu0
    %v340 = vadd.f32 0.0, %v339
    %341 = vmatmul.bf16.gmra.mxu0 %v249
    %v342 = vpop.f32.mrf.mxu0
    %v343 = vadd.f32 0.0, %v342
    %v344 = vpop.f32.mrf.mxu0
    %v345 = vadd.f32 0.0, %v344
    %346 = vmatmul.bf16.gmra.mxu0 %v250
    %v347 = vpop.f32.mrf.mxu0
    %v348 = vadd.f32 0.0, %v347
    %v349 = vpop.f32.mrf.mxu0
    %v350 = vadd.f32 0.0, %v349
    %351 = vmatmul.bf16.gmra.mxu0 %v251
    %v352 = vpop.f32.mrf.mxu0
    %v353 = vadd.f32 0.0, %v352
    %v354 = vpop.f32.mrf.mxu0
    %v355 = vadd.f32 0.0, %v354
    %356 = vmatmul.bf16.gmra.mxu0 %v252
    %v357 = vpop.f32.mrf.mxu0
    %v358 = vadd.f32 0.0, %v357
    %v359 = vpop.f32.mrf.mxu0
    %v360 = vadd.f32 0.0, %v359
    %361 = vmatmul.bf16.gmra.mxu0 %v253
    %v362 = vpop.f32.mrf.mxu0
    %v363 = vadd.f32 0.0, %v362
    %v364 = vpop.f32.mrf.mxu0
    %v365 = vadd.f32 0.0, %v364
    %366 = vdwg.mxu0
    %v367 = vadd.f32 %v230, %v328
    %v368 = vadd.f32 %v231, %v330
    %v369 = vadd.f32 %v232, %v333
    %v370 = vadd.f32 %v233, %v335
    %v371 = vadd.f32 %v234, %v338
    %v372 = vadd.f32 %v235, %v340
    %v373 = vadd.f32 %v236, %v343
    %v374 = vadd.f32 %v237, %v345
    %v375 = vadd.f32 %v238, %v348
    %v376 = vadd.f32 %v239, %v350
    %v377 = vadd.f32 %v240, %v353
    %v378 = vadd.f32 %v241, %v355
    %v379 = vadd.f32 %v242, %v358
    %v380 = vadd.f32 %v243, %v360
    %v381 = vadd.f32 %v244, %v363
    %v382 = vadd.f32 %v245, %v365
    %383 = vst [vmem:[#allocation3] sm:$0xff] %v367
    %384 = vst [vmem:[#allocation3 + $0x8] sm:$0xff] %v368
    %385 = vst [vmem:[#allocation3 + $0x10] sm:$0xff] %v369
    %386 = vst [vmem:[#allocation3 + $0x18] sm:$0xff] %v370
    %387 = vst [vmem:[#allocation3 + $0x20] sm:$0xff] %v371
    %388 = vst [vmem:[#allocation3 + $0x28] sm:$0xff] %v372
    %389 = vst [vmem:[#allocation3 + $0x30] sm:$0xff] %v373
    %390 = vst [vmem:[#allocation3 + $0x38] sm:$0xff] %v374
    %391 = vst [vmem:[#allocation3 + $0x40] sm:$0xff] %v375
    %392 = vst [vmem:[#allocation3 + $0x48] sm:$0xff] %v376
    %393 = vst [vmem:[#allocation3 + $0x50] sm:$0xff] %v377
    %394 = vst [vmem:[#allocation3 + $0x58] sm:$0xff] %v378
    %395 = vst [vmem:[#allocation3 + $0x60] sm:$0xff] %v379
    %396 = vst [vmem:[#allocation3 + $0x68] sm:$0xff] %v380
    %397 = vst [vmem:[#allocation3 + $0x70] sm:$0xff] %v381
    %398 = vst [vmem:[#allocation3 + $0x78] sm:$0xff] %v382
    %v399 = vld [vmem:[#allocation2 + $0x1] sm:$0xff]
    %v400 = vld [vmem:[#allocation2 + $0x11] sm:$0xff]
    %v401 = vld [vmem:[#allocation2 + $0x21] sm:$0xff]
    %v402 = vld [vmem:[#allocation2 + $0x31] sm:$0xff]
    %v403 = vld [vmem:[#allocation2 + $0x41] sm:$0xff]
    %v404 = vld [vmem:[#allocation2 + $0x51] sm:$0xff]
    %v405 = vld [vmem:[#allocation2 + $0x61] sm:$0xff]
    %v406 = vld [vmem:[#allocation2 + $0x71] sm:$0xff]
    %v407 = vld [vmem:[#allocation2 + $0xa1] sm:$0xff]
    %v408 = vld [vmem:[#allocation2 + $0xb1] sm:$0xff]
    %v409 = vld [vmem:[#allocation2 + $0xc1] sm:$0xff]
    %v410 = vld [vmem:[#allocation2 + $0xd1] sm:$0xff]
    %v411 = vld [vmem:[#allocation2 + $0xe1] sm:$0xff]
    %v412 = vld [vmem:[#allocation2 + $0xf1] sm:$0xff]
    %v413 = vld [vmem:[#allocation2 + $0x101] sm:$0xff]
    %v414 = vld [vmem:[#allocation2 + $0x111] sm:$0xff]
    %v415 = vld [vmem:[#allocation3] sm:$0xff]
    %v416 = vld [vmem:[#allocation3 + $0x8] sm:$0xff]
    %v417 = vld [vmem:[#allocation3 + $0x10] sm:$0xff]
    %v418 = vld [vmem:[#allocation3 + $0x18] sm:$0xff]
    %v419 = vld [vmem:[#allocation3 + $0x20] sm:$0xff]
    %v420 = vld [vmem:[#allocation3 + $0x28] sm:$0xff]
    %v421 = vld [vmem:[#allocation3 + $0x30] sm:$0xff]
    %v422 = vld [vmem:[#allocation3 + $0x38] sm:$0xff]
    %v423 = vld [vmem:[#allocation3 + $0x40] sm:$0xff]
    %v424 = vld [vmem:[#allocation3 + $0x48] sm:$0xff]
    %v425 = vld [vmem:[#allocation3 + $0x50] sm:$0xff]
    %v426 = vld [vmem:[#allocation3 + $0x58] sm:$0xff]
    %v427 = vld [vmem:[#allocation3 + $0x60] sm:$0xff]
    %v428 = vld [vmem:[#allocation3 + $0x68] sm:$0xff]
    %v429 = vld [vmem:[#allocation3 + $0x70] sm:$0xff]
    %v430 = vld [vmem:[#allocation3 + $0x78] sm:$0xff]
    %v431 = vpack.c.bf16 %v400, %v399
    %v432 = vpack.c.bf16 %v402, %v401
    %v433 = vpack.c.bf16 %v404, %v403
    %v434 = vpack.c.bf16 %v406, %v405
    %v435 = vpack.c.bf16 %v408, %v407
    %v436 = vpack.c.bf16 %v410, %v409
    %v437 = vpack.c.bf16 %v412, %v411
    %v438 = vpack.c.bf16 %v414, %v413
    %s439 = scalar_lea.vmem [#allocation7], 64
    %v440 = vld [vmem:[%s439] sm:$0xf]
    %v441 = vld [vmem:[%s439 + $0x4] sm:$0xf]
    %v442 = vld [vmem:[%s439 + $0x8] sm:$0xf]
    %v443 = vld [vmem:[%s439 + $0xc] sm:$0xf]
    %v444 = vld [vmem:[%s439 + $0x10] sm:$0xf]
    %v445 = vld [vmem:[%s439 + $0x14] sm:$0xf]
    %v446 = vld [vmem:[%s439 + $0x18] sm:$0xf]
    %v447 = vld [vmem:[%s439 + $0x1c] sm:$0xf]
    %v448 = vld [vmem:[%s439 + $0x20] sm:$0xf]
    %v449 = vld [vmem:[%s439 + $0x24] sm:$0xf]
    %v450 = vld [vmem:[%s439 + $0x28] sm:$0xf]
    %v451 = vld [vmem:[%s439 + $0x2c] sm:$0xf]
    %v452 = vld [vmem:[%s439 + $0x30] sm:$0xf]
    %v453 = vld [vmem:[%s439 + $0x34] sm:$0xf]
    %v454 = vld [vmem:[%s439 + $0x38] sm:$0xf]
    %v455 = vld [vmem:[%s439 + $0x3c] sm:$0xf]
    %v472 = vunpack.c.l.b16 %v440
    %v473 = vunpack.c.l.b16 %v441
    %v474 = vunpack.c.l.b16 %v442
    %v475 = vunpack.c.l.b16 %v443
    %v476 = vunpack.c.l.b16 %v444
    %v477 = vunpack.c.l.b16 %v445
    %v478 = vunpack.c.l.b16 %v446
    %v479 = vunpack.c.l.b16 %v447
    %v480 = vunpack.c.l.b16 %v448
    %v481 = vunpack.c.l.b16 %v449
    %v482 = vunpack.c.l.b16 %v450
    %v483 = vunpack.c.l.b16 %v451
    %v484 = vunpack.c.l.b16 %v452
    %v485 = vunpack.c.l.b16 %v453
    %v486 = vunpack.c.l.b16 %v454
    %v487 = vunpack.c.l.b16 %v455
    %v488 = vpack.c.b16 %v473, %v472
    %v489 = vpack.c.b16 %v475, %v474
    %v490 = vpack.c.b16 %v477, %v476
    %v491 = vpack.c.b16 %v479, %v478
    %v492 = vpack.c.b16 %v481, %v480
    %v493 = vpack.c.b16 %v483, %v482
    %v494 = vpack.c.b16 %v485, %v484
    %v495 = vpack.c.b16 %v487, %v486
    %504 = vmatpush.bf16.msra.mxu0 %v495
    %505 = vmatpush.bf16.msra.mxu0 %v494
    %506 = vmatpush.bf16.msra.mxu0 %v493
    %507 = vmatpush.bf16.msra.mxu0 %v492
    %508 = vmatpush.bf16.msra.mxu0 %v491
    %509 = vmatpush.bf16.msra.mxu0 %v490
    %510 = vmatpush.bf16.msra.mxu0 %v489
    %511 = vmatpush.bf16.msra.mxu0 %v488
    %512 = vmatmul.bf16.gmra.mxu0 %v431
    %v513 = vpop.f32.mrf.mxu0
    %v514 = vadd.f32 0.0, %v513
    %v515 = vpop.f32.mrf.mxu0
    %v516 = vadd.f32 0.0, %v515
    %517 = vmatmul.bf16.gmra.mxu0 %v432
    %v518 = vpop.f32.mrf.mxu0
    %v519 = vadd.f32 0.0, %v518
    %v520 = vpop.f32.mrf.mxu0
    %v521 = vadd.f32 0.0, %v520
    %522 = vmatmul.bf16.gmra.mxu0 %v433
    %v523 = vpop.f32.mrf.mxu0
    %v524 = vadd.f32 0.0, %v523
    %v525 = vpop.f32.mrf.mxu0
    %v526 = vadd.f32 0.0, %v525
    %527 = vmatmul.bf16.gmra.mxu0 %v434
    %v528 = vpop.f32.mrf.mxu0
    %v529 = vadd.f32 0.0, %v528
    %v530 = vpop.f32.mrf.mxu0
    %v531 = vadd.f32 0.0, %v530
    %532 = vmatmul.bf16.gmra.mxu0 %v435
    %v533 = vpop.f32.mrf.mxu0
    %v534 = vadd.f32 0.0, %v533
    %v535 = vpop.f32.mrf.mxu0
    %v536 = vadd.f32 0.0, %v535
    %537 = vmatmul.bf16.gmra.mxu0 %v436
    %v538 = vpop.f32.mrf.mxu0
    %v539 = vadd.f32 0.0, %v538
    %v540 = vpop.f32.mrf.mxu0
    %v541 = vadd.f32 0.0, %v540
    %542 = vmatmul.bf16.gmra.mxu0 %v437
    %v543 = vpop.f32.mrf.mxu0
    %v544 = vadd.f32 0.0, %v543
    %v545 = vpop.f32.mrf.mxu0
    %v546 = vadd.f32 0.0, %v545
    %547 = vmatmul.bf16.gmra.mxu0 %v438
    %v548 = vpop.f32.mrf.mxu0
    %v549 = vadd.f32 0.0, %v548
    %v550 = vpop.f32.mrf.mxu0
    %v551 = vadd.f32 0.0, %v550
    %552 = vdwg.mxu0
    %v553 = vadd.f32 %v415, %v514
    %v554 = vadd.f32 %v416, %v516
    %v555 = vadd.f32 %v417, %v519
    %v556 = vadd.f32 %v418, %v521
    %v557 = vadd.f32 %v419, %v524
    %v558 = vadd.f32 %v420, %v526
    %v559 = vadd.f32 %v421, %v529
    %v560 = vadd.f32 %v422, %v531
    %v561 = vadd.f32 %v423, %v534
    %v562 = vadd.f32 %v424, %v536
    %v563 = vadd.f32 %v425, %v539
    %v564 = vadd.f32 %v426, %v541
    %v565 = vadd.f32 %v427, %v544
    %v566 = vadd.f32 %v428, %v546
    %v567 = vadd.f32 %v429, %v549
    %v568 = vadd.f32 %v430, %v551
    %569 = vst [vmem:[#allocation3] sm:$0xff] %v553
    %570 = vst [vmem:[#allocation3 + $0x8] sm:$0xff] %v554
    %571 = vst [vmem:[#allocation3 + $0x10] sm:$0xff] %v555
    %572 = vst [vmem:[#allocation3 + $0x18] sm:$0xff] %v556
    %573 = vst [vmem:[#allocation3 + $0x20] sm:$0xff] %v557
    %574 = vst [vmem:[#allocation3 + $0x28] sm:$0xff] %v558
    %575 = vst [vmem:[#allocation3 + $0x30] sm:$0xff] %v559
    %576 = vst [vmem:[#allocation3 + $0x38] sm:$0xff] %v560
    %577 = vst [vmem:[#allocation3 + $0x40] sm:$0xff] %v561
    %578 = vst [vmem:[#allocation3 + $0x48] sm:$0xff] %v562
    %579 = vst [vmem:[#allocation3 + $0x50] sm:$0xff] %v563
    %580 = vst [vmem:[#allocation3 + $0x58] sm:$0xff] %v564
    %581 = vst [vmem:[#allocation3 + $0x60] sm:$0xff] %v565
    %582 = vst [vmem:[#allocation3 + $0x68] sm:$0xff] %v566
    %583 = vst [vmem:[#allocation3 + $0x70] sm:$0xff] %v567
    %584 = vst [vmem:[#allocation3 + $0x78] sm:$0xff] %v568
    %v585 = vld [vmem:[#allocation2 + $0x2] sm:$0xff]
    %v586 = vld [vmem:[#allocation2 + $0x12] sm:$0xff]
    %v587 = vld [vmem:[#allocation2 + $0x22] sm:$0xff]
    %v588 = vld [vmem:[#allocation2 + $0x32] sm:$0xff]
    %v589 = vld [vmem:[#allocation2 + $0x42] sm:$0xff]
    %v590 = vld [vmem:[#allocation2 + $0x52] sm:$0xff]
    %v591 = vld [vmem:[#allocation2 + $0x62] sm:$0xff]
    %v592 = vld [vmem:[#allocation2 + $0x72] sm:$0xff]
    %v593 = vld [vmem:[#allocation2 + $0xa2] sm:$0xff]
    %v594 = vld [vmem:[#allocation2 + $0xb2] sm:$0xff]
    %v595 = vld [vmem:[#allocation2 + $0xc2] sm:$0xff]
    %v596 = vld [vmem:[#allocation2 + $0xd2] sm:$0xff]
    %v597 = vld [vmem:[#allocation2 + $0xe2] sm:$0xff]
    %v598 = vld [vmem:[#allocation2 + $0xf2] sm:$0xff]
    %v599 = vld [vmem:[#allocation2 + $0x102] sm:$0xff]
    %v600 = vld [vmem:[#allocation2 + $0x112] sm:$0xff]
    %v601 = vld [vmem:[#allocation3] sm:$0xff]
    %v602 = vld [vmem:[#allocation3 + $0x8] sm:$0xff]
    %v603 = vld [vmem:[#allocation3 + $0x10] sm:$0xff]
    %v604 = vld [vmem:[#allocation3 + $0x18] sm:$0xff]
    %v605 = vld [vmem:[#allocation3 + $0x20] sm:$0xff]
    %v606 = vld [vmem:[#allocation3 + $0x28] sm:$0xff]
    %v607 = vld [vmem:[#allocation3 + $0x30] sm:$0xff]
    %v608 = vld [vmem:[#allocation3 + $0x38] sm:$0xff]
    %v609 = vld [vmem:[#allocation3 + $0x40] sm:$0xff]
    %v610 = vld [vmem:[#allocation3 + $0x48] sm:$0xff]
    %v611 = vld [vmem:[#allocation3 + $0x50] sm:$0xff]
    %v612 = vld [vmem:[#allocation3 + $0x58] sm:$0xff]
    %v613 = vld [vmem:[#allocation3 + $0x60] sm:$0xff]
    %v614 = vld [vmem:[#allocation3 + $0x68] sm:$0xff]
    %v615 = vld [vmem:[#allocation3 + $0x70] sm:$0xff]
    %v616 = vld [vmem:[#allocation3 + $0x78] sm:$0xff]
    %v617 = vpack.c.bf16 %v586, %v585
    %v618 = vpack.c.bf16 %v588, %v587
    %v619 = vpack.c.bf16 %v590, %v589
    %v620 = vpack.c.bf16 %v592, %v591
    %v621 = vpack.c.bf16 %v594, %v593
    %v622 = vpack.c.bf16 %v596, %v595
    %v623 = vpack.c.bf16 %v598, %v597
    %v624 = vpack.c.bf16 %v600, %v599
    %s625 = scalar_lea.vmem [#allocation7], 128
    %v626 = vld [vmem:[%s625] sm:$0xf]
    %v627 = vld [vmem:[%s625 + $0x4] sm:$0xf]
    %v628 = vld [vmem:[%s625 + $0x8] sm:$0xf]
    %v629 = vld [vmem:[%s625 + $0xc] sm:$0xf]
    %v630 = vld [vmem:[%s625 + $0x10] sm:$0xf]
    %v631 = vld [vmem:[%s625 + $0x14] sm:$0xf]
    %v632 = vld [vmem:[%s625 + $0x18] sm:$0xf]
    %v633 = vld [vmem:[%s625 + $0x1c] sm:$0xf]
    %v634 = vld [vmem:[%s625 + $0x20] sm:$0xf]
    %v635 = vld [vmem:[%s625 + $0x24] sm:$0xf]
    %v636 = vld [vmem:[%s625 + $0x28] sm:$0xf]
    %v637 = vld [vmem:[%s625 + $0x2c] sm:$0xf]
    %v638 = vld [vmem:[%s625 + $0x30] sm:$0xf]
    %v639 = vld [vmem:[%s625 + $0x34] sm:$0xf]
    %v640 = vld [vmem:[%s625 + $0x38] sm:$0xf]
    %v641 = vld [vmem:[%s625 + $0x3c] sm:$0xf]
    %v658 = vunpack.c.l.b16 %v626
    %v659 = vunpack.c.l.b16 %v627
    %v660 = vunpack.c.l.b16 %v628
    %v661 = vunpack.c.l.b16 %v629
    %v662 = vunpack.c.l.b16 %v630
    %v663 = vunpack.c.l.b16 %v631
    %v664 = vunpack.c.l.b16 %v632
    %v665 = vunpack.c.l.b16 %v633
    %v666 = vunpack.c.l.b16 %v634
    %v667 = vunpack.c.l.b16 %v635
    %v668 = vunpack.c.l.b16 %v636
    %v669 = vunpack.c.l.b16 %v637
    %v670 = vunpack.c.l.b16 %v638
    %v671 = vunpack.c.l.b16 %v639
    %v672 = vunpack.c.l.b16 %v640
    %v673 = vunpack.c.l.b16 %v641
    %v674 = vpack.c.b16 %v659, %v658
    %v675 = vpack.c.b16 %v661, %v660
    %v676 = vpack.c.b16 %v663, %v662
    %v677 = vpack.c.b16 %v665, %v664
    %v678 = vpack.c.b16 %v667, %v666
    %v679 = vpack.c.b16 %v669, %v668
    %v680 = vpack.c.b16 %v671, %v670
    %v681 = vpack.c.b16 %v673, %v672
    %690 = vmatpush.bf16.msra.mxu0 %v681
    %691 = vmatpush.bf16.msra.mxu0 %v680
    %692 = vmatpush.bf16.msra.mxu0 %v679
    %693 = vmatpush.bf16.msra.mxu0 %v678
    %694 = vmatpush.bf16.msra.mxu0 %v677
    %695 = vmatpush.bf16.msra.mxu0 %v676
    %696 = vmatpush.bf16.msra.mxu0 %v675
    %697 = vmatpush.bf16.msra.mxu0 %v674
    %698 = vmatmul.bf16.gmra.mxu0 %v617
    %v699 = vpop.f32.mrf.mxu0
    %v700 = vadd.f32 0.0, %v699
    %v701 = vpop.f32.mrf.mxu0
    %v702 = vadd.f32 0.0, %v701
    %703 = vmatmul.bf16.gmra.mxu0 %v618
    %v704 = vpop.f32.mrf.mxu0
    %v705 = vadd.f32 0.0, %v704
    %v706 = vpop.f32.mrf.mxu0
    %v707 = vadd.f32 0.0, %v706
    %708 = vmatmul.bf16.gmra.mxu0 %v619
    %v709 = vpop.f32.mrf.mxu0
    %v710 = vadd.f32 0.0, %v709
    %v711 = vpop.f32.mrf.mxu0
    %v712 = vadd.f32 0.0, %v711
    %713 = vmatmul.bf16.gmra.mxu0 %v620
    %v714 = vpop.f32.mrf.mxu0
    %v715 = vadd.f32 0.0, %v714
    %v716 = vpop.f32.mrf.mxu0
    %v717 = vadd.f32 0.0, %v716
    %718 = vmatmul.bf16.gmra.mxu0 %v621
    %v719 = vpop.f32.mrf.mxu0
    %v720 = vadd.f32 0.0, %v719
    %v721 = vpop.f32.mrf.mxu0
    %v722 = vadd.f32 0.0, %v721
    %723 = vmatmul.bf16.gmra.mxu0 %v622
    %v724 = vpop.f32.mrf.mxu0
    %v725 = vadd.f32 0.0, %v724
    %v726 = vpop.f32.mrf.mxu0
    %v727 = vadd.f32 0.0, %v726
    %728 = vmatmul.bf16.gmra.mxu0 %v623
    %v729 = vpop.f32.mrf.mxu0
    %v730 = vadd.f32 0.0, %v729
    %v731 = vpop.f32.mrf.mxu0
    %v732 = vadd.f32 0.0, %v731
    %733 = vmatmul.bf16.gmra.mxu0 %v624
    %v734 = vpop.f32.mrf.mxu0
    %v735 = vadd.f32 0.0, %v734
    %v736 = vpop.f32.mrf.mxu0
    %v737 = vadd.f32 0.0, %v736
    %738 = vdwg.mxu0
    %v739 = vadd.f32 %v601, %v700
    %v740 = vadd.f32 %v602, %v702
    %v741 = vadd.f32 %v603, %v705
    %v742 = vadd.f32 %v604, %v707
    %v743 = vadd.f32 %v605, %v710
    %v744 = vadd.f32 %v606, %v712
    %v745 = vadd.f32 %v607, %v715
    %v746 = vadd.f32 %v608, %v717
    %v747 = vadd.f32 %v609, %v720
    %v748 = vadd.f32 %v610, %v722
    %v749 = vadd.f32 %v611, %v725
    %v750 = vadd.f32 %v612, %v727
    %v751 = vadd.f32 %v613, %v730
    %v752 = vadd.f32 %v614, %v732
    %v753 = vadd.f32 %v615, %v735
    %v754 = vadd.f32 %v616, %v737
    %755 = vst [vmem:[#allocation3] sm:$0xff] %v739
    %756 = vst [vmem:[#allocation3 + $0x8] sm:$0xff] %v740
    %757 = vst [vmem:[#allocation3 + $0x10] sm:$0xff] %v741
    %758 = vst [vmem:[#allocation3 + $0x18] sm:$0xff] %v742
    %759 = vst [vmem:[#allocation3 + $0x20] sm:$0xff] %v743
    %760 = vst [vmem:[#allocation3 + $0x28] sm:$0xff] %v744
    %761 = vst [vmem:[#allocation3 + $0x30] sm:$0xff] %v745
    %762 = vst [vmem:[#allocation3 + $0x38] sm:$0xff] %v746
    %763 = vst [vmem:[#allocation3 + $0x40] sm:$0xff] %v747
    %764 = vst [vmem:[#allocation3 + $0x48] sm:$0xff] %v748
    %765 = vst [vmem:[#allocation3 + $0x50] sm:$0xff] %v749
    %766 = vst [vmem:[#allocation3 + $0x58] sm:$0xff] %v750
    %767 = vst [vmem:[#allocation3 + $0x60] sm:$0xff] %v751
    %768 = vst [vmem:[#allocation3 + $0x68] sm:$0xff] %v752
    %769 = vst [vmem:[#allocation3 + $0x70] sm:$0xff] %v753
    %770 = vst [vmem:[#allocation3 + $0x78] sm:$0xff] %v754
    %v771 = vld [vmem:[%s100] sm:$0xff]
    %v772 = vld [vmem:[%s100 + $0x10] sm:$0xff]
    %v773 = vld [vmem:[%s100 + $0x20] sm:$0xff]
    %v774 = vld [vmem:[%s100 + $0x30] sm:$0xff]
    %v775 = vld [vmem:[%s100 + $0x40] sm:$0xff]
    %v776 = vld [vmem:[%s100 + $0x50] sm:$0xff]
    %v777 = vld [vmem:[%s100 + $0x60] sm:$0xff]
    %v778 = vld [vmem:[%s100 + $0x70] sm:$0xff]
    %v779 = vld [vmem:[%s100 + $0xa0] sm:$0xff]
    %v780 = vld [vmem:[%s100 + $0xb0] sm:$0xff]
    %v781 = vld [vmem:[%s100 + $0xc0] sm:$0xff]
    %v782 = vld [vmem:[%s100 + $0xd0] sm:$0xff]
    %v783 = vld [vmem:[%s100 + $0xe0] sm:$0xff]
    %v784 = vld [vmem:[%s100 + $0xf0] sm:$0xff]
    %v785 = vld [vmem:[%s100 + $0x100] sm:$0xff]
    %v786 = vld [vmem:[%s100 + $0x110] sm:$0xff]
    %v787 = vld [vmem:[#allocation3] sm:$0xff]
    %v788 = vld [vmem:[#allocation3 + $0x8] sm:$0xff]
    %v789 = vld [vmem:[#allocation3 + $0x10] sm:$0xff]
    %v790 = vld [vmem:[#allocation3 + $0x18] sm:$0xff]
    %v791 = vld [vmem:[#allocation3 + $0x20] sm:$0xff]
    %v792 = vld [vmem:[#allocation3 + $0x28] sm:$0xff]
    %v793 = vld [vmem:[#allocation3 + $0x30] sm:$0xff]
    %v794 = vld [vmem:[#allocation3 + $0x38] sm:$0xff]
    %v795 = vld [vmem:[#allocation3 + $0x40] sm:$0xff]
    %v796 = vld [vmem:[#allocation3 + $0x48] sm:$0xff]
    %v797 = vld [vmem:[#allocation3 + $0x50] sm:$0xff]
    %v798 = vld [vmem:[#allocation3 + $0x58] sm:$0xff]
    %v799 = vld [vmem:[#allocation3 + $0x60] sm:$0xff]
    %v800 = vld [vmem:[#allocation3 + $0x68] sm:$0xff]
    %v801 = vld [vmem:[#allocation3 + $0x70] sm:$0xff]
    %v802 = vld [vmem:[#allocation3 + $0x78] sm:$0xff]
    %v803 = vpack.c.bf16 %v772, %v771
    %v804 = vpack.c.bf16 %v774, %v773
    %v805 = vpack.c.bf16 %v776, %v775
    %v806 = vpack.c.bf16 %v778, %v777
    %v807 = vpack.c.bf16 %v780, %v779
    %v808 = vpack.c.bf16 %v782, %v781
    %v809 = vpack.c.bf16 %v784, %v783
    %v810 = vpack.c.bf16 %v786, %v785
    %s811 = scalar_lea.vmem [#allocation7], 192
    %v812 = vld [vmem:[%s811] sm:$0xf]
    %v813 = vld [vmem:[%s811 + $0x4] sm:$0xf]
    %v814 = vld [vmem:[%s811 + $0x8] sm:$0xf]
    %v815 = vld [vmem:[%s811 + $0xc] sm:$0xf]
    %v816 = vld [vmem:[%s811 + $0x10] sm:$0xf]
    %v817 = vld [vmem:[%s811 + $0x14] sm:$0xf]
    %v818 = vld [vmem:[%s811 + $0x18] sm:$0xf]
    %v819 = vld [vmem:[%s811 + $0x1c] sm:$0xf]
    %v820 = vld [vmem:[%s811 + $0x20] sm:$0xf]
    %v821 = vld [vmem:[%s811 + $0x24] sm:$0xf]
    %v822 = vld [vmem:[%s811 + $0x28] sm:$0xf]
    %v823 = vld [vmem:[%s811 + $0x2c] sm:$0xf]
    %v824 = vld [vmem:[%s811 + $0x30] sm:$0xf]
    %v825 = vld [vmem:[%s811 + $0x34] sm:$0xf]
    %v826 = vld [vmem:[%s811 + $0x38] sm:$0xf]
    %v827 = vld [vmem:[%s811 + $0x3c] sm:$0xf]
    %v844 = vunpack.c.l.b16 %v812
    %v845 = vunpack.c.l.b16 %v813
    %v846 = vunpack.c.l.b16 %v814
    %v847 = vunpack.c.l.b16 %v815
    %v848 = vunpack.c.l.b16 %v816
    %v849 = vunpack.c.l.b16 %v817
    %v850 = vunpack.c.l.b16 %v818
    %v851 = vunpack.c.l.b16 %v819
    %v852 = vunpack.c.l.b16 %v820
    %v853 = vunpack.c.l.b16 %v821
    %v854 = vunpack.c.l.b16 %v822
    %v855 = vunpack.c.l.b16 %v823
    %v856 = vunpack.c.l.b16 %v824
    %v857 = vunpack.c.l.b16 %v825
    %v858 = vunpack.c.l.b16 %v826
    %v859 = vunpack.c.l.b16 %v827
    %v860 = vpack.c.b16 %v845, %v844
    %v861 = vpack.c.b16 %v847, %v846
    %v862 = vpack.c.b16 %v849, %v848
    %v863 = vpack.c.b16 %v851, %v850
    %v864 = vpack.c.b16 %v853, %v852
    %v865 = vpack.c.b16 %v855, %v854
    %v866 = vpack.c.b16 %v857, %v856
    %v867 = vpack.c.b16 %v859, %v858
    %876 = vmatpush.bf16.msra.mxu0 %v867
    %877 = vmatpush.bf16.msra.mxu0 %v866
    %878 = vmatpush.bf16.msra.mxu0 %v865
    %879 = vmatpush.bf16.msra.mxu0 %v864
    %880 = vmatpush.bf16.msra.mxu0 %v863
    %881 = vmatpush.bf16.msra.mxu0 %v862
    %882 = vmatpush.bf16.msra.mxu0 %v861
    %883 = vmatpush.bf16.msra.mxu0 %v860
    %884 = vmatmul.bf16.gmra.mxu0 %v803
    %v885 = vpop.f32.mrf.mxu0
    %v886 = vadd.f32 0.0, %v885
    %v887 = vpop.f32.mrf.mxu0
    %v888 = vadd.f32 0.0, %v887
    %889 = vmatmul.bf16.gmra.mxu0 %v804
    %v890 = vpop.f32.mrf.mxu0
    %v891 = vadd.f32 0.0, %v890
    %v892 = vpop.f32.mrf.mxu0
    %v893 = vadd.f32 0.0, %v892
    %894 = vmatmul.bf16.gmra.mxu0 %v805
    %v895 = vpop.f32.mrf.mxu0
    %v896 = vadd.f32 0.0, %v895
    %v897 = vpop.f32.mrf.mxu0
    %v898 = vadd.f32 0.0, %v897
    %899 = vmatmul.bf16.gmra.mxu0 %v806
    %v900 = vpop.f32.mrf.mxu0
    %v901 = vadd.f32 0.0, %v900
    %v902 = vpop.f32.mrf.mxu0
    %v903 = vadd.f32 0.0, %v902
    %904 = vmatmul.bf16.gmra.mxu0 %v807
    %v905 = vpop.f32.mrf.mxu0
    %v906 = vadd.f32 0.0, %v905
    %v907 = vpop.f32.mrf.mxu0
    %v908 = vadd.f32 0.0, %v907
    %909 = vmatmul.bf16.gmra.mxu0 %v808
    %v910 = vpop.f32.mrf.mxu0
    %v911 = vadd.f32 0.0, %v910
    %v912 = vpop.f32.mrf.mxu0
    %v913 = vadd.f32 0.0, %v912
    %914 = vmatmul.bf16.gmra.mxu0 %v809
    %v915 = vpop.f32.mrf.mxu0
    %v916 = vadd.f32 0.0, %v915
    %v917 = vpop.f32.mrf.mxu0
    %v918 = vadd.f32 0.0, %v917
    %919 = vmatmul.bf16.gmra.mxu0 %v810
    %v920 = vpop.f32.mrf.mxu0
    %v921 = vadd.f32 0.0, %v920
    %v922 = vpop.f32.mrf.mxu0
    %v923 = vadd.f32 0.0, %v922
    %924 = vdwg.mxu0
    %v925 = vadd.f32 %v787, %v886
    %v926 = vadd.f32 %v788, %v888
    %v927 = vadd.f32 %v789, %v891
    %v928 = vadd.f32 %v790, %v893
    %v929 = vadd.f32 %v791, %v896
    %v930 = vadd.f32 %v792, %v898
    %v931 = vadd.f32 %v793, %v901
    %v932 = vadd.f32 %v794, %v903
    %v933 = vadd.f32 %v795, %v906
    %v934 = vadd.f32 %v796, %v908
    %v935 = vadd.f32 %v797, %v911
    %v936 = vadd.f32 %v798, %v913
    %v937 = vadd.f32 %v799, %v916
    %v938 = vadd.f32 %v800, %v918
    %v939 = vadd.f32 %v801, %v921
    %v940 = vadd.f32 %v802, %v923
    %941 = vst [vmem:[#allocation3] sm:$0xff] %v925
    %942 = vst [vmem:[#allocation3 + $0x8] sm:$0xff] %v926
    %943 = vst [vmem:[#allocation3 + $0x10] sm:$0xff] %v927
    %944 = vst [vmem:[#allocation3 + $0x18] sm:$0xff] %v928
    %945 = vst [vmem:[#allocation3 + $0x20] sm:$0xff] %v929
    %946 = vst [vmem:[#allocation3 + $0x28] sm:$0xff] %v930
    %947 = vst [vmem:[#allocation3 + $0x30] sm:$0xff] %v931
    %948 = vst [vmem:[#allocation3 + $0x38] sm:$0xff] %v932
    %949 = vst [vmem:[#allocation3 + $0x40] sm:$0xff] %v933
    %950 = vst [vmem:[#allocation3 + $0x48] sm:$0xff] %v934
    %951 = vst [vmem:[#allocation3 + $0x50] sm:$0xff] %v935
    %952 = vst [vmem:[#allocation3 + $0x58] sm:$0xff] %v936
    %953 = vst [vmem:[#allocation3 + $0x60] sm:$0xff] %v937
    %954 = vst [vmem:[#allocation3 + $0x68] sm:$0xff] %v938
    %955 = vst [vmem:[#allocation3 + $0x70] sm:$0xff] %v939
    %956 = vst [vmem:[#allocation3 + $0x78] sm:$0xff] %v940
    %v957 = vld [vmem:[%s100 + $0x1] sm:$0xff]
    %v958 = vld [vmem:[%s100 + $0x11] sm:$0xff]
    %v959 = vld [vmem:[%s100 + $0x21] sm:$0xff]
    %v960 = vld [vmem:[%s100 + $0x31] sm:$0xff]
    %v961 = vld [vmem:[%s100 + $0x41] sm:$0xff]
    %v962 = vld [vmem:[%s100 + $0x51] sm:$0xff]
    %v963 = vld [vmem:[%s100 + $0x61] sm:$0xff]
    %v964 = vld [vmem:[%s100 + $0x71] sm:$0xff]
    %v965 = vld [vmem:[%s100 + $0xa1] sm:$0xff]
    %v966 = vld [vmem:[%s100 + $0xb1] sm:$0xff]
    %v967 = vld [vmem:[%s100 + $0xc1] sm:$0xff]
    %v968 = vld [vmem:[%s100 + $0xd1] sm:$0xff]
    %v969 = vld [vmem:[%s100 + $0xe1] sm:$0xff]
    %v970 = vld [vmem:[%s100 + $0xf1] sm:$0xff]
    %v971 = vld [vmem:[%s100 + $0x101] sm:$0xff]
    %v972 = vld [vmem:[%s100 + $0x111] sm:$0xff]
    %v973 = vld [vmem:[#allocation3] sm:$0xff]
    %v974 = vld [vmem:[#allocation3 + $0x8] sm:$0xff]
    %v975 = vld [vmem:[#allocation3 + $0x10] sm:$0xff]
    %v976 = vld [vmem:[#allocation3 + $0x18] sm:$0xff]
    %v977 = vld [vmem:[#allocation3 + $0x20] sm:$0xff]
    %v978 = vld [vmem:[#allocation3 + $0x28] sm:$0xff]
    %v979 = vld [vmem:[#allocation3 + $0x30] sm:$0xff]
    %v980 = vld [vmem:[#allocation3 + $0x38] sm:$0xff]
    %v981 = vld [vmem:[#allocation3 + $0x40] sm:$0xff]
    %v982 = vld [vmem:[#allocation3 + $0x48] sm:$0xff]
    %v983 = vld [vmem:[#allocation3 + $0x50] sm:$0xff]
    %v984 = vld [vmem:[#allocation3 + $0x58] sm:$0xff]
    %v985 = vld [vmem:[#allocation3 + $0x60] sm:$0xff]
    %v986 = vld [vmem:[#allocation3 + $0x68] sm:$0xff]
    %v987 = vld [vmem:[#allocation3 + $0x70] sm:$0xff]
    %v988 = vld [vmem:[#allocation3 + $0x78] sm:$0xff]
    %v989 = vpack.c.bf16 %v958, %v957
    %v990 = vpack.c.bf16 %v960, %v959
    %v991 = vpack.c.bf16 %v962, %v961
    %v992 = vpack.c.bf16 %v964, %v963
    %v993 = vpack.c.bf16 %v966, %v965
    %v994 = vpack.c.bf16 %v968, %v967
    %v995 = vpack.c.bf16 %v970, %v969
    %v996 = vpack.c.bf16 %v972, %v971
    %s997 = scalar_lea.vmem [#allocation7], 256
    %v998 = vld [vmem:[%s997] sm:$0xf]
    %v999 = vld [vmem:[%s997 + $0x4] sm:$0xf]
    %v1000 = vld [vmem:[%s997 + $0x8] sm:$0xf]
    %v1001 = vld [vmem:[%s997 + $0xc] sm:$0xf]
    %v1002 = vld [vmem:[%s997 + $0x10] sm:$0xf]
    %v1003 = vld [vmem:[%s997 + $0x14] sm:$0xf]
    %v1004 = vld [vmem:[%s997 + $0x18] sm:$0xf]
    %v1005 = vld [vmem:[%s997 + $0x1c] sm:$0xf]
    %v1006 = vld [vmem:[%s997 + $0x20] sm:$0xf]
    %v1007 = vld [vmem:[%s997 + $0x24] sm:$0xf]
    %v1008 = vld [vmem:[%s997 + $0x28] sm:$0xf]
    %v1009 = vld [vmem:[%s997 + $0x2c] sm:$0xf]
    %v1010 = vld [vmem:[%s997 + $0x30] sm:$0xf]
    %v1011 = vld [vmem:[%s997 + $0x34] sm:$0xf]
    %v1012 = vld [vmem:[%s997 + $0x38] sm:$0xf]
    %v1013 = vld [vmem:[%s997 + $0x3c] sm:$0xf]
    %v1030 = vunpack.c.l.b16 %v998
    %v1031 = vunpack.c.l.b16 %v999
    %v1032 = vunpack.c.l.b16 %v1000
    %v1033 = vunpack.c.l.b16 %v1001
    %v1034 = vunpack.c.l.b16 %v1002
    %v1035 = vunpack.c.l.b16 %v1003
    %v1036 = vunpack.c.l.b16 %v1004
    %v1037 = vunpack.c.l.b16 %v1005
    %v1038 = vunpack.c.l.b16 %v1006
    %v1039 = vunpack.c.l.b16 %v1007
    %v1040 = vunpack.c.l.b16 %v1008
    %v1041 = vunpack.c.l.b16 %v1009
    %v1042 = vunpack.c.l.b16 %v1010
    %v1043 = vunpack.c.l.b16 %v1011
    %v1044 = vunpack.c.l.b16 %v1012
    %v1045 = vunpack.c.l.b16 %v1013
    %v1046 = vpack.c.b16 %v1031, %v1030
    %v1047 = vpack.c.b16 %v1033, %v1032
    %v1048 = vpack.c.b16 %v1035, %v1034
    %v1049 = vpack.c.b16 %v1037, %v1036
    %v1050 = vpack.c.b16 %v1039, %v1038
    %v1051 = vpack.c.b16 %v1041, %v1040
    %v1052 = vpack.c.b16 %v1043, %v1042
    %v1053 = vpack.c.b16 %v1045, %v1044
    %1062 = vmatpush.bf16.msra.mxu0 %v1053
    %1063 = vmatpush.bf16.msra.mxu0 %v1052
    %1064 = vmatpush.bf16.msra.mxu0 %v1051
    %1065 = vmatpush.bf16.msra.mxu0 %v1050
    %1066 = vmatpush.bf16.msra.mxu0 %v1049
    %1067 = vmatpush.bf16.msra.mxu0 %v1048
    %1068 = vmatpush.bf16.msra.mxu0 %v1047
    %1069 = vmatpush.bf16.msra.mxu0 %v1046
    %1070 = vmatmul.bf16.gmra.mxu0 %v989
    %v1071 = vpop.f32.mrf.mxu0
    %v1072 = vadd.f32 0.0, %v1071
    %v1073 = vpop.f32.mrf.mxu0
    %v1074 = vadd.f32 0.0, %v1073
    %1075 = vmatmul.bf16.gmra.mxu0 %v990
    %v1076 = vpop.f32.mrf.mxu0
    %v1077 = vadd.f32 0.0, %v1076
    %v1078 = vpop.f32.mrf.mxu0
    %v1079 = vadd.f32 0.0, %v1078
    %1080 = vmatmul.bf16.gmra.mxu0 %v991
    %v1081 = vpop.f32.mrf.mxu0
    %v1082 = vadd.f32 0.0, %v1081
    %v1083 = vpop.f32.mrf.mxu0
    %v1084 = vadd.f32 0.0, %v1083
    %1085 = vmatmul.bf16.gmra.mxu0 %v992
    %v1086 = vpop.f32.mrf.mxu0
    %v1087 = vadd.f32 0.0, %v1086
    %v1088 = vpop.f32.mrf.mxu0
    %v1089 = vadd.f32 0.0, %v1088
    %1090 = vmatmul.bf16.gmra.mxu0 %v993
    %v1091 = vpop.f32.mrf.mxu0
    %v1092 = vadd.f32 0.0, %v1091
    %v1093 = vpop.f32.mrf.mxu0
    %v1094 = vadd.f32 0.0, %v1093
    %1095 = vmatmul.bf16.gmra.mxu0 %v994
    %v1096 = vpop.f32.mrf.mxu0
    %v1097 = vadd.f32 0.0, %v1096
    %v1098 = vpop.f32.mrf.mxu0
    %v1099 = vadd.f32 0.0, %v1098
    %1100 = vmatmul.bf16.gmra.mxu0 %v995
    %v1101 = vpop.f32.mrf.mxu0
    %v1102 = vadd.f32 0.0, %v1101
    %v1103 = vpop.f32.mrf.mxu0
    %v1104 = vadd.f32 0.0, %v1103
    %1105 = vmatmul.bf16.gmra.mxu0 %v996
    %v1106 = vpop.f32.mrf.mxu0
    %v1107 = vadd.f32 0.0, %v1106
    %v1108 = vpop.f32.mrf.mxu0
    %v1109 = vadd.f32 0.0, %v1108
    %1110 = vdwg.mxu0
    %v1111 = vadd.f32 %v973, %v1072
    %v1112 = vadd.f32 %v974, %v1074
    %v1113 = vadd.f32 %v975, %v1077
    %v1114 = vadd.f32 %v976, %v1079
    %v1115 = vadd.f32 %v977, %v1082
    %v1116 = vadd.f32 %v978, %v1084
    %v1117 = vadd.f32 %v979, %v1087
    %v1118 = vadd.f32 %v980, %v1089
    %v1119 = vadd.f32 %v981, %v1092
    %v1120 = vadd.f32 %v982, %v1094
    %v1121 = vadd.f32 %v983, %v1097
    %v1122 = vadd.f32 %v984, %v1099
    %v1123 = vadd.f32 %v985, %v1102
    %v1124 = vadd.f32 %v986, %v1104
    %v1125 = vadd.f32 %v987, %v1107
    %v1126 = vadd.f32 %v988, %v1109
    %1127 = vst [vmem:[#allocation3] sm:$0xff] %v1111
    %1128 = vst [vmem:[#allocation3 + $0x8] sm:$0xff] %v1112
    %1129 = vst [vmem:[#allocation3 + $0x10] sm:$0xff] %v1113
    %1130 = vst [vmem:[#allocation3 + $0x18] sm:$0xff] %v1114
    %1131 = vst [vmem:[#allocation3 + $0x20] sm:$0xff] %v1115
    %1132 = vst [vmem:[#allocation3 + $0x28] sm:$0xff] %v1116
    %1133 = vst [vmem:[#allocation3 + $0x30] sm:$0xff] %v1117
    %1134 = vst [vmem:[#allocation3 + $0x38] sm:$0xff] %v1118
    %1135 = vst [vmem:[#allocation3 + $0x40] sm:$0xff] %v1119
    %1136 = vst [vmem:[#allocation3 + $0x48] sm:$0xff] %v1120
    %1137 = vst [vmem:[#allocation3 + $0x50] sm:$0xff] %v1121
    %1138 = vst [vmem:[#allocation3 + $0x58] sm:$0xff] %v1122
    %1139 = vst [vmem:[#allocation3 + $0x60] sm:$0xff] %v1123
    %1140 = vst [vmem:[#allocation3 + $0x68] sm:$0xff] %v1124
    %1141 = vst [vmem:[#allocation3 + $0x70] sm:$0xff] %v1125
    %1142 = vst [vmem:[#allocation3 + $0x78] sm:$0xff] %v1126
    %v1143 = vld [vmem:[%s100 + $0x2] sm:$0xff]
    %v1144 = vld [vmem:[%s100 + $0x12] sm:$0xff]
    %v1145 = vld [vmem:[%s100 + $0x22] sm:$0xff]
    %v1146 = vld [vmem:[%s100 + $0x32] sm:$0xff]
    %v1147 = vld [vmem:[%s100 + $0x42] sm:$0xff]
    %v1148 = vld [vmem:[%s100 + $0x52] sm:$0xff]
    %v1149 = vld [vmem:[%s100 + $0x62] sm:$0xff]
    %v1150 = vld [vmem:[%s100 + $0x72] sm:$0xff]
    %v1151 = vld [vmem:[%s100 + $0xa2] sm:$0xff]
    %v1152 = vld [vmem:[%s100 + $0xb2] sm:$0xff]
    %v1153 = vld [vmem:[%s100 + $0xc2] sm:$0xff]
    %v1154 = vld [vmem:[%s100 + $0xd2] sm:$0xff]
    %v1155 = vld [vmem:[%s100 + $0xe2] sm:$0xff]
    %v1156 = vld [vmem:[%s100 + $0xf2] sm:$0xff]
    %v1157 = vld [vmem:[%s100 + $0x102] sm:$0xff]
    %v1158 = vld [vmem:[%s100 + $0x112] sm:$0xff]
    %v1159 = vld [vmem:[#allocation3] sm:$0xff]
    %v1160 = vld [vmem:[#allocation3 + $0x8] sm:$0xff]
    %v1161 = vld [vmem:[#allocation3 + $0x10] sm:$0xff]
    %v1162 = vld [vmem:[#allocation3 + $0x18] sm:$0xff]
    %v1163 = vld [vmem:[#allocation3 + $0x20] sm:$0xff]
    %v1164 = vld [vmem:[#allocation3 + $0x28] sm:$0xff]
    %v1165 = vld [vmem:[#allocation3 + $0x30] sm:$0xff]
    %v1166 = vld [vmem:[#allocation3 + $0x38] sm:$0xff]
    %v1167 = vld [vmem:[#allocation3 + $0x40] sm:$0xff]
    %v1168 = vld [vmem:[#allocation3 + $0x48] sm:$0xff]
    %v1169 = vld [vmem:[#allocation3 + $0x50] sm:$0xff]
    %v1170 = vld [vmem:[#allocation3 + $0x58] sm:$0xff]
    %v1171 = vld [vmem:[#allocation3 + $0x60] sm:$0xff]
    %v1172 = vld [vmem:[#allocation3 + $0x68] sm:$0xff]
    %v1173 = vld [vmem:[#allocation3 + $0x70] sm:$0xff]
    %v1174 = vld [vmem:[#allocation3 + $0x78] sm:$0xff]
    %v1175 = vpack.c.bf16 %v1144, %v1143
    %v1176 = vpack.c.bf16 %v1146, %v1145
    %v1177 = vpack.c.bf16 %v1148, %v1147
    %v1178 = vpack.c.bf16 %v1150, %v1149
    %v1179 = vpack.c.bf16 %v1152, %v1151
    %v1180 = vpack.c.bf16 %v1154, %v1153
    %v1181 = vpack.c.bf16 %v1156, %v1155
    %v1182 = vpack.c.bf16 %v1158, %v1157
    %s1183 = scalar_lea.vmem [#allocation7], 320
    %v1184 = vld [vmem:[%s1183] sm:$0xf]
    %v1185 = vld [vmem:[%s1183 + $0x4] sm:$0xf]
    %v1186 = vld [vmem:[%s1183 + $0x8] sm:$0xf]
    %v1187 = vld [vmem:[%s1183 + $0xc] sm:$0xf]
    %v1188 = vld [vmem:[%s1183 + $0x10] sm:$0xf]
    %v1189 = vld [vmem:[%s1183 + $0x14] sm:$0xf]
    %v1190 = vld [vmem:[%s1183 + $0x18] sm:$0xf]
    %v1191 = vld [vmem:[%s1183 + $0x1c] sm:$0xf]
    %v1192 = vld [vmem:[%s1183 + $0x20] sm:$0xf]
    %v1193 = vld [vmem:[%s1183 + $0x24] sm:$0xf]
    %v1194 = vld [vmem:[%s1183 + $0x28] sm:$0xf]
    %v1195 = vld [vmem:[%s1183 + $0x2c] sm:$0xf]
    %v1196 = vld [vmem:[%s1183 + $0x30] sm:$0xf]
    %v1197 = vld [vmem:[%s1183 + $0x34] sm:$0xf]
    %v1198 = vld [vmem:[%s1183 + $0x38] sm:$0xf]
    %v1199 = vld [vmem:[%s1183 + $0x3c] sm:$0xf]
    %v1216 = vunpack.c.l.b16 %v1184
    %v1217 = vunpack.c.l.b16 %v1185
    %v1218 = vunpack.c.l.b16 %v1186
    %v1219 = vunpack.c.l.b16 %v1187
    %v1220 = vunpack.c.l.b16 %v1188
    %v1221 = vunpack.c.l.b16 %v1189
    %v1222 = vunpack.c.l.b16 %v1190
    %v1223 = vunpack.c.l.b16 %v1191
    %v1224 = vunpack.c.l.b16 %v1192
    %v1225 = vunpack.c.l.b16 %v1193
    %v1226 = vunpack.c.l.b16 %v1194
    %v1227 = vunpack.c.l.b16 %v1195
    %v1228 = vunpack.c.l.b16 %v1196
    %v1229 = vunpack.c.l.b16 %v1197
    %v1230 = vunpack.c.l.b16 %v1198
    %v1231 = vunpack.c.l.b16 %v1199
    %v1232 = vpack.c.b16 %v1217, %v1216
    %v1233 = vpack.c.b16 %v1219, %v1218
    %v1234 = vpack.c.b16 %v1221, %v1220
    %v1235 = vpack.c.b16 %v1223, %v1222
    %v1236 = vpack.c.b16 %v1225, %v1224
    %v1237 = vpack.c.b16 %v1227, %v1226
    %v1238 = vpack.c.b16 %v1229, %v1228
    %v1239 = vpack.c.b16 %v1231, %v1230
    %1248 = vmatpush.bf16.msra.mxu0 %v1239
    %1249 = vmatpush.bf16.msra.mxu0 %v1238
    %1250 = vmatpush.bf16.msra.mxu0 %v1237
    %1251 = vmatpush.bf16.msra.mxu0 %v1236
    %1252 = vmatpush.bf16.msra.mxu0 %v1235
    %1253 = vmatpush.bf16.msra.mxu0 %v1234
    %1254 = vmatpush.bf16.msra.mxu0 %v1233
    %1255 = vmatpush.bf16.msra.mxu0 %v1232
    %1256 = vmatmul.bf16.gmra.mxu0 %v1175
    %v1257 = vpop.f32.mrf.mxu0
    %v1258 = vadd.f32 0.0, %v1257
    %v1259 = vpop.f32.mrf.mxu0
    %v1260 = vadd.f32 0.0, %v1259
    %1261 = vmatmul.bf16.gmra.mxu0 %v1176
    %v1262 = vpop.f32.mrf.mxu0
    %v1263 = vadd.f32 0.0, %v1262
    %v1264 = vpop.f32.mrf.mxu0
    %v1265 = vadd.f32 0.0, %v1264
    %1266 = vmatmul.bf16.gmra.mxu0 %v1177
    %v1267 = vpop.f32.mrf.mxu0
    %v1268 = vadd.f32 0.0, %v1267
    %v1269 = vpop.f32.mrf.mxu0
    %v1270 = vadd.f32 0.0, %v1269
    %1271 = vmatmul.bf16.gmra.mxu0 %v1178
    %v1272 = vpop.f32.mrf.mxu0
    %v1273 = vadd.f32 0.0, %v1272
    %v1274 = vpop.f32.mrf.mxu0
    %v1275 = vadd.f32 0.0, %v1274
    %1276 = vmatmul.bf16.gmra.mxu0 %v1179
    %v1277 = vpop.f32.mrf.mxu0
    %v1278 = vadd.f32 0.0, %v1277
    %v1279 = vpop.f32.mrf.mxu0
    %v1280 = vadd.f32 0.0, %v1279
    %1281 = vmatmul.bf16.gmra.mxu0 %v1180
    %v1282 = vpop.f32.mrf.mxu0
    %v1283 = vadd.f32 0.0, %v1282
    %v1284 = vpop.f32.mrf.mxu0
    %v1285 = vadd.f32 0.0, %v1284
    %1286 = vmatmul.bf16.gmra.mxu0 %v1181
    %v1287 = vpop.f32.mrf.mxu0
    %v1288 = vadd.f32 0.0, %v1287
    %v1289 = vpop.f32.mrf.mxu0
    %v1290 = vadd.f32 0.0, %v1289
    %1291 = vmatmul.bf16.gmra.mxu0 %v1182
    %v1292 = vpop.f32.mrf.mxu0
    %v1293 = vadd.f32 0.0, %v1292
    %v1294 = vpop.f32.mrf.mxu0
    %v1295 = vadd.f32 0.0, %v1294
    %1296 = vdwg.mxu0
    %v1297 = vadd.f32 %v1159, %v1258
    %v1298 = vadd.f32 %v1160, %v1260
    %v1299 = vadd.f32 %v1161, %v1263
    %v1300 = vadd.f32 %v1162, %v1265
    %v1301 = vadd.f32 %v1163, %v1268
    %v1302 = vadd.f32 %v1164, %v1270
    %v1303 = vadd.f32 %v1165, %v1273
    %v1304 = vadd.f32 %v1166, %v1275
    %v1305 = vadd.f32 %v1167, %v1278
    %v1306 = vadd.f32 %v1168, %v1280
    %v1307 = vadd.f32 %v1169, %v1283
    %v1308 = vadd.f32 %v1170, %v1285
    %v1309 = vadd.f32 %v1171, %v1288
    %v1310 = vadd.f32 %v1172, %v1290
    %v1311 = vadd.f32 %v1173, %v1293
    %v1312 = vadd.f32 %v1174, %v1295
    %1313 = vst [vmem:[#allocation3] sm:$0xff] %v1297
    %1314 = vst [vmem:[#allocation3 + $0x8] sm:$0xff] %v1298
    %1315 = vst [vmem:[#allocation3 + $0x10] sm:$0xff] %v1299
    %1316 = vst [vmem:[#allocation3 + $0x18] sm:$0xff] %v1300
    %1317 = vst [vmem:[#allocation3 + $0x20] sm:$0xff] %v1301
    %1318 = vst [vmem:[#allocation3 + $0x28] sm:$0xff] %v1302
    %1319 = vst [vmem:[#allocation3 + $0x30] sm:$0xff] %v1303
    %1320 = vst [vmem:[#allocation3 + $0x38] sm:$0xff] %v1304
    %1321 = vst [vmem:[#allocation3 + $0x40] sm:$0xff] %v1305
    %1322 = vst [vmem:[#allocation3 + $0x48] sm:$0xff] %v1306
    %1323 = vst [vmem:[#allocation3 + $0x50] sm:$0xff] %v1307
    %1324 = vst [vmem:[#allocation3 + $0x58] sm:$0xff] %v1308
    %1325 = vst [vmem:[#allocation3 + $0x60] sm:$0xff] %v1309
    %1326 = vst [vmem:[#allocation3 + $0x68] sm:$0xff] %v1310
    %1327 = vst [vmem:[#allocation3 + $0x70] sm:$0xff] %v1311
    %1328 = vst [vmem:[#allocation3 + $0x78] sm:$0xff] %v1312
    %s1329 = scalar_lea.vmem [#allocation2], 32
    %v1330 = vld [vmem:[%s1329] sm:$0xff]
    %v1331 = vld [vmem:[%s1329 + $0x10] sm:$0xff]
    %v1332 = vld [vmem:[%s1329 + $0x20] sm:$0xff]
    %v1333 = vld [vmem:[%s1329 + $0x30] sm:$0xff]
    %v1334 = vld [vmem:[%s1329 + $0x40] sm:$0xff]
    %v1335 = vld [vmem:[%s1329 + $0x50] sm:$0xff]
    %v1336 = vld [vmem:[%s1329 + $0x60] sm:$0xff]
    %v1337 = vld [vmem:[%s1329 + $0x70] sm:$0xff]
    %v1338 = vld [vmem:[%s1329 + $0xa0] sm:$0xff]
    %v1339 = vld [vmem:[%s1329 + $0xb0] sm:$0xff]
    %v1340 = vld [vmem:[%s1329 + $0xc0] sm:$0xff]
    %v1341 = vld [vmem:[%s1329 + $0xd0] sm:$0xff]
    %v1342 = vld [vmem:[%s1329 + $0xe0] sm:$0xff]
    %v1343 = vld [vmem:[%s1329 + $0xf0] sm:$0xff]
    %v1344 = vld [vmem:[%s1329 + $0x100] sm:$0xff]
    %v1345 = vld [vmem:[%s1329 + $0x110] sm:$0xff]
    %v1346 = vld [vmem:[#allocation3] sm:$0xff]
    %v1347 = vld [vmem:[#allocation3 + $0x8] sm:$0xff]
    %v1348 = vld [vmem:[#allocation3 + $0x10] sm:$0xff]
    %v1349 = vld [vmem:[#allocation3 + $0x18] sm:$0xff]
    %v1350 = vld [vmem:[#allocation3 + $0x20] sm:$0xff]
    %v1351 = vld [vmem:[#allocation3 + $0x28] sm:$0xff]
    %v1352 = vld [vmem:[#allocation3 + $0x30] sm:$0xff]
    %v1353 = vld [vmem:[#allocation3 + $0x38] sm:$0xff]
    %v1354 = vld [vmem:[#allocation3 + $0x40] sm:$0xff]
    %v1355 = vld [vmem:[#allocation3 + $0x48] sm:$0xff]
    %v1356 = vld [vmem:[#allocation3 + $0x50] sm:$0xff]
    %v1357 = vld [vmem:[#allocation3 + $0x58] sm:$0xff]
    %v1358 = vld [vmem:[#allocation3 + $0x60] sm:$0xff]
    %v1359 = vld [vmem:[#allocation3 + $0x68] sm:$0xff]
    %v1360 = vld [vmem:[#allocation3 + $0x70] sm:$0xff]
    %v1361 = vld [vmem:[#allocation3 + $0x78] sm:$0xff]
    %v1362 = vpack.c.bf16 %v1331, %v1330
    %v1363 = vpack.c.bf16 %v1333, %v1332
    %v1364 = vpack.c.bf16 %v1335, %v1334
    %v1365 = vpack.c.bf16 %v1337, %v1336
    %v1366 = vpack.c.bf16 %v1339, %v1338
    %v1367 = vpack.c.bf16 %v1341, %v1340
    %v1368 = vpack.c.bf16 %v1343, %v1342
    %v1369 = vpack.c.bf16 %v1345, %v1344
    %s1370 = scalar_lea.vmem [#allocation7], 384
    %v1371 = vld [vmem:[%s1370] sm:$0xf]
    %v1372 = vld [vmem:[%s1370 + $0x4] sm:$0xf]
    %v1373 = vld [vmem:[%s1370 + $0x8] sm:$0xf]
    %v1374 = vld [vmem:[%s1370 + $0xc] sm:$0xf]
    %v1375 = vld [vmem:[%s1370 + $0x10] sm:$0xf]
    %v1376 = vld [vmem:[%s1370 + $0x14] sm:$0xf]
    %v1377 = vld [vmem:[%s1370 + $0x18] sm:$0xf]
    %v1378 = vld [vmem:[%s1370 + $0x1c] sm:$0xf]
    %v1379 = vld [vmem:[%s1370 + $0x20] sm:$0xf]
    %v1380 = vld [vmem:[%s1370 + $0x24] sm:$0xf]
    %v1381 = vld [vmem:[%s1370 + $0x28] sm:$0xf]
    %v1382 = vld [vmem:[%s1370 + $0x2c] sm:$0xf]
    %v1383 = vld [vmem:[%s1370 + $0x30] sm:$0xf]
    %v1384 = vld [vmem:[%s1370 + $0x34] sm:$0xf]
    %v1385 = vld [vmem:[%s1370 + $0x38] sm:$0xf]
    %v1386 = vld [vmem:[%s1370 + $0x3c] sm:$0xf]
    %v1403 = vunpack.c.l.b16 %v1371
    %v1404 = vunpack.c.l.b16 %v1372
    %v1405 = vunpack.c.l.b16 %v1373
    %v1406 = vunpack.c.l.b16 %v1374
    %v1407 = vunpack.c.l.b16 %v1375
    %v1408 = vunpack.c.l.b16 %v1376
    %v1409 = vunpack.c.l.b16 %v1377
    %v1410 = vunpack.c.l.b16 %v1378
    %v1411 = vunpack.c.l.b16 %v1379
    %v1412 = vunpack.c.l.b16 %v1380
    %v1413 = vunpack.c.l.b16 %v1381
    %v1414 = vunpack.c.l.b16 %v1382
    %v1415 = vunpack.c.l.b16 %v1383
    %v1416 = vunpack.c.l.b16 %v1384
    %v1417 = vunpack.c.l.b16 %v1385
    %v1418 = vunpack.c.l.b16 %v1386
    %v1419 = vpack.c.b16 %v1404, %v1403
    %v1420 = vpack.c.b16 %v1406, %v1405
    %v1421 = vpack.c.b16 %v1408, %v1407
    %v1422 = vpack.c.b16 %v1410, %v1409
    %v1423 = vpack.c.b16 %v1412, %v1411
    %v1424 = vpack.c.b16 %v1414, %v1413
    %v1425 = vpack.c.b16 %v1416, %v1415
    %v1426 = vpack.c.b16 %v1418, %v1417
    %1435 = vmatpush.bf16.msra.mxu0 %v1426
    %1436 = vmatpush.bf16.msra.mxu0 %v1425
    %1437 = vmatpush.bf16.msra.mxu0 %v1424
    %1438 = vmatpush.bf16.msra.mxu0 %v1423
    %1439 = vmatpush.bf16.msra.mxu0 %v1422
    %1440 = vmatpush.bf16.msra.mxu0 %v1421
    %1441 = vmatpush.bf16.msra.mxu0 %v1420
    %1442 = vmatpush.bf16.msra.mxu0 %v1419
    %1443 = vmatmul.bf16.gmra.mxu0 %v1362
    %v1444 = vpop.f32.mrf.mxu0
    %v1445 = vadd.f32 0.0, %v1444
    %v1446 = vpop.f32.mrf.mxu0
    %v1447 = vadd.f32 0.0, %v1446
    %1448 = vmatmul.bf16.gmra.mxu0 %v1363
    %v1449 = vpop.f32.mrf.mxu0
    %v1450 = vadd.f32 0.0, %v1449
    %v1451 = vpop.f32.mrf.mxu0
    %v1452 = vadd.f32 0.0, %v1451
    %1453 = vmatmul.bf16.gmra.mxu0 %v1364
    %v1454 = vpop.f32.mrf.mxu0
    %v1455 = vadd.f32 0.0, %v1454
    %v1456 = vpop.f32.mrf.mxu0
    %v1457 = vadd.f32 0.0, %v1456
    %1458 = vmatmul.bf16.gmra.mxu0 %v1365
    %v1459 = vpop.f32.mrf.mxu0
    %v1460 = vadd.f32 0.0, %v1459
    %v1461 = vpop.f32.mrf.mxu0
    %v1462 = vadd.f32 0.0, %v1461
    %1463 = vmatmul.bf16.gmra.mxu0 %v1366
    %v1464 = vpop.f32.mrf.mxu0
    %v1465 = vadd.f32 0.0, %v1464
    %v1466 = vpop.f32.mrf.mxu0
    %v1467 = vadd.f32 0.0, %v1466
    %1468 = vmatmul.bf16.gmra.mxu0 %v1367
    %v1469 = vpop.f32.mrf.mxu0
    %v1470 = vadd.f32 0.0, %v1469
    %v1471 = vpop.f32.mrf.mxu0
    %v1472 = vadd.f32 0.0, %v1471
    %1473 = vmatmul.bf16.gmra.mxu0 %v1368
    %v1474 = vpop.f32.mrf.mxu0
    %v1475 = vadd.f32 0.0, %v1474
    %v1476 = vpop.f32.mrf.mxu0
    %v1477 = vadd.f32 0.0, %v1476
    %1478 = vmatmul.bf16.gmra.mxu0 %v1369
    %v1479 = vpop.f32.mrf.mxu0
    %v1480 = vadd.f32 0.0, %v1479
    %v1481 = vpop.f32.mrf.mxu0
    %v1482 = vadd.f32 0.0, %v1481
    %1483 = vdwg.mxu0
    %v1484 = vadd.f32 %v1346, %v1445
    %v1485 = vadd.f32 %v1347, %v1447
    %v1486 = vadd.f32 %v1348, %v1450
    %v1487 = vadd.f32 %v1349, %v1452
    %v1488 = vadd.f32 %v1350, %v1455
    %v1489 = vadd.f32 %v1351, %v1457
    %v1490 = vadd.f32 %v1352, %v1460
    %v1491 = vadd.f32 %v1353, %v1462
    %v1492 = vadd.f32 %v1354, %v1465
    %v1493 = vadd.f32 %v1355, %v1467
    %v1494 = vadd.f32 %v1356, %v1470
    %v1495 = vadd.f32 %v1357, %v1472
    %v1496 = vadd.f32 %v1358, %v1475
    %v1497 = vadd.f32 %v1359, %v1477
    %v1498 = vadd.f32 %v1360, %v1480
    %v1499 = vadd.f32 %v1361, %v1482
    %1500 = vst [vmem:[#allocation3] sm:$0xff] %v1484
    %1501 = vst [vmem:[#allocation3 + $0x8] sm:$0xff] %v1485
    %1502 = vst [vmem:[#allocation3 + $0x10] sm:$0xff] %v1486
    %1503 = vst [vmem:[#allocation3 + $0x18] sm:$0xff] %v1487
    %1504 = vst [vmem:[#allocation3 + $0x20] sm:$0xff] %v1488
    %1505 = vst [vmem:[#allocation3 + $0x28] sm:$0xff] %v1489
    %1506 = vst [vmem:[#allocation3 + $0x30] sm:$0xff] %v1490
    %1507 = vst [vmem:[#allocation3 + $0x38] sm:$0xff] %v1491
    %1508 = vst [vmem:[#allocation3 + $0x40] sm:$0xff] %v1492
    %1509 = vst [vmem:[#allocation3 + $0x48] sm:$0xff] %v1493
    %1510 = vst [vmem:[#allocation3 + $0x50] sm:$0xff] %v1494
    %1511 = vst [vmem:[#allocation3 + $0x58] sm:$0xff] %v1495
    %1512 = vst [vmem:[#allocation3 + $0x60] sm:$0xff] %v1496
    %1513 = vst [vmem:[#allocation3 + $0x68] sm:$0xff] %v1497
    %1514 = vst [vmem:[#allocation3 + $0x70] sm:$0xff] %v1498
    %1515 = vst [vmem:[#allocation3 + $0x78] sm:$0xff] %v1499
    %v1516 = vld [vmem:[%s1329 + $0x1] sm:$0xff]
    %v1517 = vld [vmem:[%s1329 + $0x11] sm:$0xff]
    %v1518 = vld [vmem:[%s1329 + $0x21] sm:$0xff]
    %v1519 = vld [vmem:[%s1329 + $0x31] sm:$0xff]
    %v1520 = vld [vmem:[%s1329 + $0x41] sm:$0xff]
    %v1521 = vld [vmem:[%s1329 + $0x51] sm:$0xff]
    %v1522 = vld [vmem:[%s1329 + $0x61] sm:$0xff]
    %v1523 = vld [vmem:[%s1329 + $0x71] sm:$0xff]
    %v1524 = vld [vmem:[%s1329 + $0xa1] sm:$0xff]
    %v1525 = vld [vmem:[%s1329 + $0xb1] sm:$0xff]
    %v1526 = vld [vmem:[%s1329 + $0xc1] sm:$0xff]
    %v1527 = vld [vmem:[%s1329 + $0xd1] sm:$0xff]
    %v1528 = vld [vmem:[%s1329 + $0xe1] sm:$0xff]
    %v1529 = vld [vmem:[%s1329 + $0xf1] sm:$0xff]
    %v1530 = vld [vmem:[%s1329 + $0x101] sm:$0xff]
    %v1531 = vld [vmem:[%s1329 + $0x111] sm:$0xff]
    %v1532 = vld [vmem:[#allocation3] sm:$0xff]
    %v1533 = vld [vmem:[#allocation3 + $0x8] sm:$0xff]
    %v1534 = vld [vmem:[#allocation3 + $0x10] sm:$0xff]
    %v1535 = vld [vmem:[#allocation3 + $0x18] sm:$0xff]
    %v1536 = vld [vmem:[#allocation3 + $0x20] sm:$0xff]
    %v1537 = vld [vmem:[#allocation3 + $0x28] sm:$0xff]
    %v1538 = vld [vmem:[#allocation3 + $0x30] sm:$0xff]
    %v1539 = vld [vmem:[#allocation3 + $0x38] sm:$0xff]
    %v1540 = vld [vmem:[#allocation3 + $0x40] sm:$0xff]
    %v1541 = vld [vmem:[#allocation3 + $0x48] sm:$0xff]
    %v1542 = vld [vmem:[#allocation3 + $0x50] sm:$0xff]
    %v1543 = vld [vmem:[#allocation3 + $0x58] sm:$0xff]
    %v1544 = vld [vmem:[#allocation3 + $0x60] sm:$0xff]
    %v1545 = vld [vmem:[#allocation3 + $0x68] sm:$0xff]
    %v1546 = vld [vmem:[#allocation3 + $0x70] sm:$0xff]
    %v1547 = vld [vmem:[#allocation3 + $0x78] sm:$0xff]
    %v1548 = vpack.c.bf16 %v1517, %v1516
    %v1549 = vpack.c.bf16 %v1519, %v1518
    %v1550 = vpack.c.bf16 %v1521, %v1520
    %v1551 = vpack.c.bf16 %v1523, %v1522
    %v1552 = vpack.c.bf16 %v1525, %v1524
    %v1553 = vpack.c.bf16 %v1527, %v1526
    %v1554 = vpack.c.bf16 %v1529, %v1528
    %v1555 = vpack.c.bf16 %v1531, %v1530
    %s1556 = scalar_lea.vmem [#allocation7], 448
    %v1557 = vld [vmem:[%s1556] sm:$0xf]
    %v1558 = vld [vmem:[%s1556 + $0x4] sm:$0xf]
    %v1559 = vld [vmem:[%s1556 + $0x8] sm:$0xf]
    %v1560 = vld [vmem:[%s1556 + $0xc] sm:$0xf]
    %v1561 = vld [vmem:[%s1556 + $0x10] sm:$0xf]
    %v1562 = vld [vmem:[%s1556 + $0x14] sm:$0xf]
    %v1563 = vld [vmem:[%s1556 + $0x18] sm:$0xf]
    %v1564 = vld [vmem:[%s1556 + $0x1c] sm:$0xf]
    %v1565 = vld [vmem:[%s1556 + $0x20] sm:$0xf]
    %v1566 = vld [vmem:[%s1556 + $0x24] sm:$0xf]
    %v1567 = vld [vmem:[%s1556 + $0x28] sm:$0xf]
    %v1568 = vld [vmem:[%s1556 + $0x2c] sm:$0xf]
    %v1569 = vld [vmem:[%s1556 + $0x30] sm:$0xf]
    %v1570 = vld [vmem:[%s1556 + $0x34] sm:$0xf]
    %v1571 = vld [vmem:[%s1556 + $0x38] sm:$0xf]
    %v1572 = vld [vmem:[%s1556 + $0x3c] sm:$0xf]
    %v1589 = vunpack.c.l.b16 %v1557
    %v1590 = vunpack.c.l.b16 %v1558
    %v1591 = vunpack.c.l.b16 %v1559
    %v1592 = vunpack.c.l.b16 %v1560
    %v1593 = vunpack.c.l.b16 %v1561
    %v1594 = vunpack.c.l.b16 %v1562
    %v1595 = vunpack.c.l.b16 %v1563
    %v1596 = vunpack.c.l.b16 %v1564
    %v1597 = vunpack.c.l.b16 %v1565
    %v1598 = vunpack.c.l.b16 %v1566
    %v1599 = vunpack.c.l.b16 %v1567
    %v1600 = vunpack.c.l.b16 %v1568
    %v1601 = vunpack.c.l.b16 %v1569
    %v1602 = vunpack.c.l.b16 %v1570
    %v1603 = vunpack.c.l.b16 %v1571
    %v1604 = vunpack.c.l.b16 %v1572
    %v1605 = vpack.c.b16 %v1590, %v1589
    %v1606 = vpack.c.b16 %v1592, %v1591
    %v1607 = vpack.c.b16 %v1594, %v1593
    %v1608 = vpack.c.b16 %v1596, %v1595
    %v1609 = vpack.c.b16 %v1598, %v1597
    %v1610 = vpack.c.b16 %v1600, %v1599
    %v1611 = vpack.c.b16 %v1602, %v1601
    %v1612 = vpack.c.b16 %v1604, %v1603
    %1621 = vmatpush.bf16.msra.mxu0 %v1612
    %1622 = vmatpush.bf16.msra.mxu0 %v1611
    %1623 = vmatpush.bf16.msra.mxu0 %v1610
    %1624 = vmatpush.bf16.msra.mxu0 %v1609
    %1625 = vmatpush.bf16.msra.mxu0 %v1608
    %1626 = vmatpush.bf16.msra.mxu0 %v1607
    %1627 = vmatpush.bf16.msra.mxu0 %v1606
    %1628 = vmatpush.bf16.msra.mxu0 %v1605
    %1629 = vmatmul.bf16.gmra.mxu0 %v1548
    %v1630 = vpop.f32.mrf.mxu0
    %v1631 = vadd.f32 0.0, %v1630
    %v1632 = vpop.f32.mrf.mxu0
    %v1633 = vadd.f32 0.0, %v1632
    %1634 = vmatmul.bf16.gmra.mxu0 %v1549
    %v1635 = vpop.f32.mrf.mxu0
    %v1636 = vadd.f32 0.0, %v1635
    %v1637 = vpop.f32.mrf.mxu0
    %v1638 = vadd.f32 0.0, %v1637
    %1639 = vmatmul.bf16.gmra.mxu0 %v1550
    %v1640 = vpop.f32.mrf.mxu0
    %v1641 = vadd.f32 0.0, %v1640
    %v1642 = vpop.f32.mrf.mxu0
    %v1643 = vadd.f32 0.0, %v1642
    %1644 = vmatmul.bf16.gmra.mxu0 %v1551
    %v1645 = vpop.f32.mrf.mxu0
    %v1646 = vadd.f32 0.0, %v1645
    %v1647 = vpop.f32.mrf.mxu0
    %v1648 = vadd.f32 0.0, %v1647
    %1649 = vmatmul.bf16.gmra.mxu0 %v1552
    %v1650 = vpop.f32.mrf.mxu0
    %v1651 = vadd.f32 0.0, %v1650
    %v1652 = vpop.f32.mrf.mxu0
    %v1653 = vadd.f32 0.0, %v1652
    %1654 = vmatmul.bf16.gmra.mxu0 %v1553
    %v1655 = vpop.f32.mrf.mxu0
    %v1656 = vadd.f32 0.0, %v1655
    %v1657 = vpop.f32.mrf.mxu0
    %v1658 = vadd.f32 0.0, %v1657
    %1659 = vmatmul.bf16.gmra.mxu0 %v1554
    %v1660 = vpop.f32.mrf.mxu0
    %v1661 = vadd.f32 0.0, %v1660
    %v1662 = vpop.f32.mrf.mxu0
    %v1663 = vadd.f32 0.0, %v1662
    %1664 = vmatmul.bf16.gmra.mxu0 %v1555
    %v1665 = vpop.f32.mrf.mxu0
    %v1666 = vadd.f32 0.0, %v1665
    %v1667 = vpop.f32.mrf.mxu0
    %v1668 = vadd.f32 0.0, %v1667
    %1669 = vdwg.mxu0
    %v1670 = vadd.f32 %v1532, %v1631
    %v1671 = vadd.f32 %v1533, %v1633
    %v1672 = vadd.f32 %v1534, %v1636
    %v1673 = vadd.f32 %v1535, %v1638
    %v1674 = vadd.f32 %v1536, %v1641
    %v1675 = vadd.f32 %v1537, %v1643
    %v1676 = vadd.f32 %v1538, %v1646
    %v1677 = vadd.f32 %v1539, %v1648
    %v1678 = vadd.f32 %v1540, %v1651
    %v1679 = vadd.f32 %v1541, %v1653
    %v1680 = vadd.f32 %v1542, %v1656
    %v1681 = vadd.f32 %v1543, %v1658
    %v1682 = vadd.f32 %v1544, %v1661
    %v1683 = vadd.f32 %v1545, %v1663
    %v1684 = vadd.f32 %v1546, %v1666
    %v1685 = vadd.f32 %v1547, %v1668
    %1686 = vst [vmem:[#allocation3] sm:$0xff] %v1670
    %1687 = vst [vmem:[#allocation3 + $0x8] sm:$0xff] %v1671
    %1688 = vst [vmem:[#allocation3 + $0x10] sm:$0xff] %v1672
    %1689 = vst [vmem:[#allocation3 + $0x18] sm:$0xff] %v1673
    %1690 = vst [vmem:[#allocation3 + $0x20] sm:$0xff] %v1674
    %1691 = vst [vmem:[#allocation3 + $0x28] sm:$0xff] %v1675
    %1692 = vst [vmem:[#allocation3 + $0x30] sm:$0xff] %v1676
    %1693 = vst [vmem:[#allocation3 + $0x38] sm:$0xff] %v1677
    %1694 = vst [vmem:[#allocation3 + $0x40] sm:$0xff] %v1678
    %1695 = vst [vmem:[#allocation3 + $0x48] sm:$0xff] %v1679
    %1696 = vst [vmem:[#allocation3 + $0x50] sm:$0xff] %v1680
    %1697 = vst [vmem:[#allocation3 + $0x58] sm:$0xff] %v1681
    %1698 = vst [vmem:[#allocation3 + $0x60] sm:$0xff] %v1682
    %1699 = vst [vmem:[#allocation3 + $0x68] sm:$0xff] %v1683
    %1700 = vst [vmem:[#allocation3 + $0x70] sm:$0xff] %v1684
    %1701 = vst [vmem:[#allocation3 + $0x78] sm:$0xff] %v1685
    %v1702 = vld [vmem:[%s1329 + $0x2] sm:$0xff]
    %v1703 = vld [vmem:[%s1329 + $0x12] sm:$0xff]
    %v1704 = vld [vmem:[%s1329 + $0x22] sm:$0xff]
    %v1705 = vld [vmem:[%s1329 + $0x32] sm:$0xff]
    %v1706 = vld [vmem:[%s1329 + $0x42] sm:$0xff]
    %v1707 = vld [vmem:[%s1329 + $0x52] sm:$0xff]
    %v1708 = vld [vmem:[%s1329 + $0x62] sm:$0xff]
    %v1709 = vld [vmem:[%s1329 + $0x72] sm:$0xff]
    %v1710 = vld [vmem:[%s1329 + $0xa2] sm:$0xff]
    %v1711 = vld [vmem:[%s1329 + $0xb2] sm:$0xff]
    %v1712 = vld [vmem:[%s1329 + $0xc2] sm:$0xff]
    %v1713 = vld [vmem:[%s1329 + $0xd2] sm:$0xff]
    %v1714 = vld [vmem:[%s1329 + $0xe2] sm:$0xff]
    %v1715 = vld [vmem:[%s1329 + $0xf2] sm:$0xff]
    %v1716 = vld [vmem:[%s1329 + $0x102] sm:$0xff]
    %v1717 = vld [vmem:[%s1329 + $0x112] sm:$0xff]
    %v1718 = vld [vmem:[#allocation3] sm:$0xff]
    %v1719 = vld [vmem:[#allocation3 + $0x8] sm:$0xff]
    %v1720 = vld [vmem:[#allocation3 + $0x10] sm:$0xff]
    %v1721 = vld [vmem:[#allocation3 + $0x18] sm:$0xff]
    %v1722 = vld [vmem:[#allocation3 + $0x20] sm:$0xff]
    %v1723 = vld [vmem:[#allocation3 + $0x28] sm:$0xff]
    %v1724 = vld [vmem:[#allocation3 + $0x30] sm:$0xff]
    %v1725 = vld [vmem:[#allocation3 + $0x38] sm:$0xff]
    %v1726 = vld [vmem:[#allocation3 + $0x40] sm:$0xff]
    %v1727 = vld [vmem:[#allocation3 + $0x48] sm:$0xff]
    %v1728 = vld [vmem:[#allocation3 + $0x50] sm:$0xff]
    %v1729 = vld [vmem:[#allocation3 + $0x58] sm:$0xff]
    %v1730 = vld [vmem:[#allocation3 + $0x60] sm:$0xff]
    %v1731 = vld [vmem:[#allocation3 + $0x68] sm:$0xff]
    %v1732 = vld [vmem:[#allocation3 + $0x70] sm:$0xff]
    %v1733 = vld [vmem:[#allocation3 + $0x78] sm:$0xff]
    %v1734 = vpack.c.bf16 %v1703, %v1702
    %v1735 = vpack.c.bf16 %v1705, %v1704
    %v1736 = vpack.c.bf16 %v1707, %v1706
    %v1737 = vpack.c.bf16 %v1709, %v1708
    %v1738 = vpack.c.bf16 %v1711, %v1710
    %v1739 = vpack.c.bf16 %v1713, %v1712
    %v1740 = vpack.c.bf16 %v1715, %v1714
    %v1741 = vpack.c.bf16 %v1717, %v1716
    %s1742 = scalar_lea.vmem [#allocation7], 512
    %v1743 = vld [vmem:[%s1742] sm:$0xf]
    %v1744 = vld [vmem:[%s1742 + $0x4] sm:$0xf]
    %v1745 = vld [vmem:[%s1742 + $0x8] sm:$0xf]
    %v1746 = vld [vmem:[%s1742 + $0xc] sm:$0xf]
    %v1747 = vld [vmem:[%s1742 + $0x10] sm:$0xf]
    %v1748 = vld [vmem:[%s1742 + $0x14] sm:$0xf]
    %v1749 = vld [vmem:[%s1742 + $0x18] sm:$0xf]
    %v1750 = vld [vmem:[%s1742 + $0x1c] sm:$0xf]
    %v1751 = vld [vmem:[%s1742 + $0x20] sm:$0xf]
    %v1752 = vld [vmem:[%s1742 + $0x24] sm:$0xf]
    %v1753 = vld [vmem:[%s1742 + $0x28] sm:$0xf]
    %v1754 = vld [vmem:[%s1742 + $0x2c] sm:$0xf]
    %v1755 = vld [vmem:[%s1742 + $0x30] sm:$0xf]
    %v1756 = vld [vmem:[%s1742 + $0x34] sm:$0xf]
    %v1757 = vld [vmem:[%s1742 + $0x38] sm:$0xf]
    %v1758 = vld [vmem:[%s1742 + $0x3c] sm:$0xf]
    %v1775 = vunpack.c.l.b16 %v1743
    %v1776 = vunpack.c.l.b16 %v1744
    %v1777 = vunpack.c.l.b16 %v1745
    %v1778 = vunpack.c.l.b16 %v1746
    %v1779 = vunpack.c.l.b16 %v1747
    %v1780 = vunpack.c.l.b16 %v1748
    %v1781 = vunpack.c.l.b16 %v1749
    %v1782 = vunpack.c.l.b16 %v1750
    %v1783 = vunpack.c.l.b16 %v1751
    %v1784 = vunpack.c.l.b16 %v1752
    %v1785 = vunpack.c.l.b16 %v1753
    %v1786 = vunpack.c.l.b16 %v1754
    %v1787 = vunpack.c.l.b16 %v1755
    %v1788 = vunpack.c.l.b16 %v1756
    %v1789 = vunpack.c.l.b16 %v1757
    %v1790 = vunpack.c.l.b16 %v1758
    %v1791 = vpack.c.b16 %v1776, %v1775
    %v1792 = vpack.c.b16 %v1778, %v1777
    %v1793 = vpack.c.b16 %v1780, %v1779
    %v1794 = vpack.c.b16 %v1782, %v1781
    %v1795 = vpack.c.b16 %v1784, %v1783
    %v1796 = vpack.c.b16 %v1786, %v1785
    %v1797 = vpack.c.b16 %v1788, %v1787
    %v1798 = vpack.c.b16 %v1790, %v1789
    %1807 = vmatpush.bf16.msra.mxu0 %v1798
    %1808 = vmatpush.bf16.msra.mxu0 %v1797
    %1809 = vmatpush.bf16.msra.mxu0 %v1796
    %1810 = vmatpush.bf16.msra.mxu0 %v1795
    %1811 = vmatpush.bf16.msra.mxu0 %v1794
    %1812 = vmatpush.bf16.msra.mxu0 %v1793
    %1813 = vmatpush.bf16.msra.mxu0 %v1792
    %1814 = vmatpush.bf16.msra.mxu0 %v1791
    %1815 = vmatmul.bf16.gmra.mxu0 %v1734
    %v1816 = vpop.f32.mrf.mxu0
    %v1817 = vadd.f32 0.0, %v1816
    %v1818 = vpop.f32.mrf.mxu0
    %v1819 = vadd.f32 0.0, %v1818
    %1820 = vmatmul.bf16.gmra.mxu0 %v1735
    %v1821 = vpop.f32.mrf.mxu0
    %v1822 = vadd.f32 0.0, %v1821
    %v1823 = vpop.f32.mrf.mxu0
    %v1824 = vadd.f32 0.0, %v1823
    %1825 = vmatmul.bf16.gmra.mxu0 %v1736
    %v1826 = vpop.f32.mrf.mxu0
    %v1827 = vadd.f32 0.0, %v1826
    %v1828 = vpop.f32.mrf.mxu0
    %v1829 = vadd.f32 0.0, %v1828
    %1830 = vmatmul.bf16.gmra.mxu0 %v1737
    %v1831 = vpop.f32.mrf.mxu0
    %v1832 = vadd.f32 0.0, %v1831
    %v1833 = vpop.f32.mrf.mxu0
    %v1834 = vadd.f32 0.0, %v1833
    %1835 = vmatmul.bf16.gmra.mxu0 %v1738
    %v1836 = vpop.f32.mrf.mxu0
    %v1837 = vadd.f32 0.0, %v1836
    %v1838 = vpop.f32.mrf.mxu0
    %v1839 = vadd.f32 0.0, %v1838
    %1840 = vmatmul.bf16.gmra.mxu0 %v1739
    %v1841 = vpop.f32.mrf.mxu0
    %v1842 = vadd.f32 0.0, %v1841
    %v1843 = vpop.f32.mrf.mxu0
    %v1844 = vadd.f32 0.0, %v1843
    %1845 = vmatmul.bf16.gmra.mxu0 %v1740
    %v1846 = vpop.f32.mrf.mxu0
    %v1847 = vadd.f32 0.0, %v1846
    %v1848 = vpop.f32.mrf.mxu0
    %v1849 = vadd.f32 0.0, %v1848
    %1850 = vmatmul.bf16.gmra.mxu0 %v1741
    %v1851 = vpop.f32.mrf.mxu0
    %v1852 = vadd.f32 0.0, %v1851
    %v1853 = vpop.f32.mrf.mxu0
    %v1854 = vadd.f32 0.0, %v1853
    %1855 = vdwg.mxu0
    %v1856 = vadd.f32 %v1718, %v1817
    %v1857 = vadd.f32 %v1719, %v1819
    %v1858 = vadd.f32 %v1720, %v1822
    %v1859 = vadd.f32 %v1721, %v1824
    %v1860 = vadd.f32 %v1722, %v1827
    %v1861 = vadd.f32 %v1723, %v1829
    %v1862 = vadd.f32 %v1724, %v1832
    %v1863 = vadd.f32 %v1725, %v1834
    %v1864 = vadd.f32 %v1726, %v1837
    %v1865 = vadd.f32 %v1727, %v1839
    %v1866 = vadd.f32 %v1728, %v1842
    %v1867 = vadd.f32 %v1729, %v1844
    %v1868 = vadd.f32 %v1730, %v1847
    %v1869 = vadd.f32 %v1731, %v1849
    %v1870 = vadd.f32 %v1732, %v1852
    %v1871 = vadd.f32 %v1733, %v1854
    %1872 = vst [vmem:[#allocation3] sm:$0xff] %v1856
    %1873 = vst [vmem:[#allocation3 + $0x8] sm:$0xff] %v1857
    %1874 = vst [vmem:[#allocation3 + $0x10] sm:$0xff] %v1858
    %1875 = vst [vmem:[#allocation3 + $0x18] sm:$0xff] %v1859
    %1876 = vst [vmem:[#allocation3 + $0x20] sm:$0xff] %v1860
    %1877 = vst [vmem:[#allocation3 + $0x28] sm:$0xff] %v1861
    %1878 = vst [vmem:[#allocation3 + $0x30] sm:$0xff] %v1862
    %1879 = vst [vmem:[#allocation3 + $0x38] sm:$0xff] %v1863
    %1880 = vst [vmem:[#allocation3 + $0x40] sm:$0xff] %v1864
    %1881 = vst [vmem:[#allocation3 + $0x48] sm:$0xff] %v1865
    %1882 = vst [vmem:[#allocation3 + $0x50] sm:$0xff] %v1866
    %1883 = vst [vmem:[#allocation3 + $0x58] sm:$0xff] %v1867
    %1884 = vst [vmem:[#allocation3 + $0x60] sm:$0xff] %v1868
    %1885 = vst [vmem:[#allocation3 + $0x68] sm:$0xff] %v1869
    %1886 = vst [vmem:[#allocation3 + $0x70] sm:$0xff] %v1870
    %1887 = vst [vmem:[#allocation3 + $0x78] sm:$0xff] %v1871
    %v1888 = vld [vmem:[#allocation3] sm:$0xff]
    %v1889 = vld [vmem:[#allocation3 + $0x8] sm:$0xff]
    %v1890 = vld [vmem:[#allocation3 + $0x10] sm:$0xff]
    %v1891 = vld [vmem:[#allocation3 + $0x18] sm:$0xff]
    %v1892 = vld [vmem:[#allocation3 + $0x20] sm:$0xff]
    %v1893 = vld [vmem:[#allocation3 + $0x28] sm:$0xff]
    %v1894 = vld [vmem:[#allocation3 + $0x30] sm:$0xff]
    %v1895 = vld [vmem:[#allocation3 + $0x38] sm:$0xff]
    %v1896 = vld [vmem:[#allocation3 + $0x40] sm:$0xff]
    %v1897 = vld [vmem:[#allocation3 + $0x48] sm:$0xff]
    %v1898 = vld [vmem:[#allocation3 + $0x50] sm:$0xff]
    %v1899 = vld [vmem:[#allocation3 + $0x58] sm:$0xff]
    %v1900 = vld [vmem:[#allocation3 + $0x60] sm:$0xff]
    %v1901 = vld [vmem:[#allocation3 + $0x68] sm:$0xff]
    %v1902 = vld [vmem:[#allocation3 + $0x70] sm:$0xff]
    %v1903 = vld [vmem:[#allocation3 + $0x78] sm:$0xff]
    %v1904 = vadd.f32 %v1888, %v1889
    %v1905 = vadd.f32 %v1904, %v1890
    %v1906 = vadd.f32 %v1905, %v1891
    %v1907 = vadd.f32 %v1906, %v1892
    %v1908 = vadd.f32 %v1907, %v1893
    %v1909 = vadd.f32 %v1908, %v1894
    %v1910 = vadd.f32 %v1909, %v1895
    %v1911 = vadd.f32 %v1910, %v1896
    %v1912 = vadd.f32 %v1911, %v1897
    %v1913 = vadd.f32 %v1912, %v1898
    %v1914 = vadd.f32 %v1913, %v1899
    %v1915 = vadd.f32 %v1914, %v1900
    %v1916 = vadd.f32 %v1915, %v1901
    %v1917 = vadd.f32 %v1916, %v1902
    %v1918 = vadd.f32 %v1917, %v1903
    %v1919 = vrot.slane %v1918, 4
    %v1920 = vadd.f32 %v1918, %v1919
    %v1921 = vrot.slane %v1920, 2
    %v1922 = vadd.f32 %v1920, %v1921
    %v1923 = vrot.slane %v1922, 1
    %v1924 = vadd.f32 %v1922, %v1923
    %v1925 = vmul.f32 %v1924, 0.0078125
    %v1926 = vsub.f32 %v1888, %v1925
    %v1927 = vsub.f32 %v1889, %v1925
    %v1928 = vsub.f32 %v1890, %v1925
    %v1929 = vsub.f32 %v1891, %v1925
    %v1930 = vsub.f32 %v1892, %v1925
    %v1931 = vsub.f32 %v1893, %v1925
    %v1932 = vsub.f32 %v1894, %v1925
    %v1933 = vsub.f32 %v1895, %v1925
    %v1934 = vsub.f32 %v1896, %v1925
    %v1935 = vsub.f32 %v1897, %v1925
    %v1936 = vsub.f32 %v1898, %v1925
    %v1937 = vsub.f32 %v1899, %v1925
    %v1938 = vsub.f32 %v1900, %v1925
    %v1939 = vsub.f32 %v1901, %v1925
    %v1940 = vsub.f32 %v1902, %v1925
    %v1941 = vsub.f32 %v1903, %v1925
    %v1942 = vmul.f32 %v1926, %v1926
    %v1943 = vmul.f32 %v1927, %v1927
    %v1944 = vmul.f32 %v1928, %v1928
    %v1945 = vmul.f32 %v1929, %v1929
    %v1946 = vmul.f32 %v1930, %v1930
    %v1947 = vmul.f32 %v1931, %v1931
    %v1948 = vmul.f32 %v1932, %v1932
    %v1949 = vmul.f32 %v1933, %v1933
    %v1950 = vmul.f32 %v1934, %v1934
    %v1951 = vmul.f32 %v1935, %v1935
    %v1952 = vmul.f32 %v1936, %v1936
    %v1953 = vmul.f32 %v1937, %v1937
    %v1954 = vmul.f32 %v1938, %v1938
    %v1955 = vmul.f32 %v1939, %v1939
    %v1956 = vmul.f32 %v1940, %v1940
    %v1957 = vmul.f32 %v1941, %v1941
    %v1958 = vadd.f32 %v1942, %v1943
    %v1959 = vadd.f32 %v1958, %v1944
    %v1960 = vadd.f32 %v1959, %v1945
    %v1961 = vadd.f32 %v1960, %v1946
    %v1962 = vadd.f32 %v1961, %v1947
    %v1963 = vadd.f32 %v1962, %v1948
    %v1964 = vadd.f32 %v1963, %v1949
    %v1965 = vadd.f32 %v1964, %v1950
    %v1966 = vadd.f32 %v1965, %v1951
    %v1967 = vadd.f32 %v1966, %v1952
    %v1968 = vadd.f32 %v1967, %v1953
    %v1969 = vadd.f32 %v1968, %v1954
    %v1970 = vadd.f32 %v1969, %v1955
    %v1971 = vadd.f32 %v1970, %v1956
    %v1972 = vadd.f32 %v1971, %v1957
    %v1973 = vrot.slane %v1972, 4
    %v1974 = vadd.f32 %v1972, %v1973
    %v1975 = vrot.slane %v1974, 2
    %v1976 = vadd.f32 %v1974, %v1975
    %v1977 = vrot.slane %v1976, 1
    %v1978 = vadd.f32 %v1976, %v1977
    %v1979 = vmul.f32 %v1978, 0.0078125
    %v1980 = vadd.f32 %v1979, 1e-05
    %v1981 = vrsqrt.pop %v1980
    %v1982 = vmul.f32 %v1981, %v1980
    %v1983 = vmul.f32 %v1982, %v1981
    %v1984 = vmul.f32 0.5, %v1983
    %v1985 = vsub.f32 1.5, %v1984
    %v1986 = vmul.f32 %v1981, %v1985
    %vm1987 = vweird.f32 %v1980
    %vm1988 = vweird.f32 %v1981
    %vm1989 = vmor %vm1987, %vm1988
    %v1990 = vsel %vm1989, %v1981, %v1986
    %v1991 = vld [vmem:[%s2] sm:$0x1]
    %v1992 = vmul.f32 %v1990, %v1991
    %v1993 = vld [vmem:[%s3] sm:$0x1]
    %v1994 = vmul.f32 %v1925, %v1992
    %v1995 = vsub.f32 %v1993, %v1994
    %v1996 = vperm.slane %v1992, 0
    %v1997 = vmul.f32 %v1888, %v1996
    %v1998 = vmul.f32 %v1889, %v1996
    %v1999 = vmul.f32 %v1890, %v1996
    %v2000 = vmul.f32 %v1891, %v1996
    %v2001 = vmul.f32 %v1892, %v1996
    %v2002 = vmul.f32 %v1893, %v1996
    %v2003 = vmul.f32 %v1894, %v1996
    %v2004 = vmul.f32 %v1895, %v1996
    %v2005 = vmul.f32 %v1896, %v1996
    %v2006 = vmul.f32 %v1897, %v1996
    %v2007 = vmul.f32 %v1898, %v1996
    %v2008 = vmul.f32 %v1899, %v1996
    %v2009 = vmul.f32 %v1900, %v1996
    %v2010 = vmul.f32 %v1901, %v1996
    %v2011 = vmul.f32 %v1902, %v1996
    %v2012 = vmul.f32 %v1903, %v1996
    %v2014 = vperm.slane %v1995, 0
    %v2016 = vadd.f32 %v1997, %v2014
    %v2017 = vadd.f32 %v1998, %v2014
    %v2018 = vadd.f32 %v1999, %v2014
    %v2019 = vadd.f32 %v2000, %v2014
    %v2020 = vadd.f32 %v2001, %v2014
    %v2021 = vadd.f32 %v2002, %v2014
    %v2022 = vadd.f32 %v2003, %v2014
    %v2023 = vadd.f32 %v2004, %v2014
    %v2024 = vadd.f32 %v2005, %v2014
    %v2025 = vadd.f32 %v2006, %v2014
    %v2026 = vadd.f32 %v2007, %v2014
    %v2027 = vadd.f32 %v2008, %v2014
    %v2028 = vadd.f32 %v2009, %v2014
    %v2029 = vadd.f32 %v2010, %v2014
    %v2030 = vadd.f32 %v2011, %v2014
    %v2031 = vadd.f32 %v2012, %v2014
    %v2032 = vmax.f32 %v2016, 0.0
    %v2033 = vmax.f32 %v2017, 0.0
    %v2034 = vmax.f32 %v2018, 0.0
    %v2035 = vmax.f32 %v2019, 0.0
    %v2036 = vmax.f32 %v2020, 0.0
    %v2037 = vmax.f32 %v2021, 0.0
    %v2038 = vmax.f32 %v2022, 0.0
    %v2039 = vmax.f32 %v2023, 0.0
    %v2040 = vmax.f32 %v2024, 0.0
    %v2041 = vmax.f32 %v2025, 0.0
    %v2042 = vmax.f32 %v2026, 0.0
    %v2043 = vmax.f32 %v2027, 0.0
    %v2044 = vmax.f32 %v2028, 0.0
    %v2045 = vmax.f32 %v2029, 0.0
    %v2046 = vmax.f32 %v2030, 0.0
    %v2047 = vmax.f32 %v2031, 0.0
    %2048 = vst [vmem:[#allocation9] sm:$0xff] %v2032
    %2049 = vst [vmem:[#allocation9 + $0x8] sm:$0xff] %v2033
    %2050 = vst [vmem:[#allocation9 + $0x10] sm:$0xff] %v2034
    %2051 = vst [vmem:[#allocation9 + $0x18] sm:$0xff] %v2035
    %2052 = vst [vmem:[#allocation9 + $0x20] sm:$0xff] %v2036
    %2053 = vst [vmem:[#allocation9 + $0x28] sm:$0xff] %v2037
    %2054 = vst [vmem:[#allocation9 + $0x30] sm:$0xff] %v2038
    %2055 = vst [vmem:[#allocation9 + $0x38] sm:$0xff] %v2039
    %2056 = vst [vmem:[#allocation9 + $0x40] sm:$0xff] %v2040
    %2057 = vst [vmem:[#allocation9 + $0x48] sm:$0xff] %v2041
    %2058 = vst [vmem:[#allocation9 + $0x50] sm:$0xff] %v2042
    %2059 = vst [vmem:[#allocation9 + $0x58] sm:$0xff] %v2043
    %2060 = vst [vmem:[#allocation9 + $0x60] sm:$0xff] %v2044
    %2061 = vst [vmem:[#allocation9 + $0x68] sm:$0xff] %v2045
    %2062 = vst [vmem:[#allocation9 + $0x70] sm:$0xff] %v2046
    %2063 = vst [vmem:[#allocation9 + $0x78] sm:$0xff] %v2047
    // Predicated region
    $region26: #{tpu_custom_call.1} parent=1 // pred_check
      _
    $region27: #{tpu_custom_call.1} parent=1 // pred_check_branch
      %2065 = sbr.rel (0) target = $region29
    $region28: #{tpu_custom_call.1} parent=1 // pred_region
      %2067 = vsyncadd [#allocation6], 0
      %s2068 = sshll.u32 [#allocation9], 4
      %s2069 = int_to_ptr.vmem [resolvable:$true] %s2068
      %s2070 = sshll.u32 %s4, 4
      %s2071 = int_to_ptr.hbm [resolvable:$true] %s2070
      %2076 = dma.vmem_to_hbm [thread:$0]  %s2069, 2048, %s2071, [#allocation6], 128, 128, 8
    $region29: #{tpu_custom_call.1} parent=1 // pred_fallthru
      _
    // Predicated region
    $region30: #{tpu_custom_call.1} parent=1 // pred_check
      _
    $region31: #{tpu_custom_call.1} parent=1 // pred_check_branch
      %2078 = sbr.rel (0) target = $region33
    $region32: #{tpu_custom_call.1} parent=1 // pred_region
      %2080 = dma.done [#allocation6], 2048
    $region33: #{tpu_custom_call.1} parent=1 // pred_fallthru
      _
    %2081 = vsyncpa [#allocation5], 1
    %2082 = vsyncpa [#allocation8], 1
    %2083 = vsyncpa [#allocation6], 1

</llo_original>
